<compile_context>
chip_gen: v7x
topology: tpu7x:2x2x1
jax: 0.10.0
libtpu: 0.0.40
codegen_flags: <defaults>
</compile_context>

<pallas_src>
import functools

import jax
import jax.numpy as jnp
from jax.experimental import pallas as pl
from jax.experimental.pallas import tpu as pltpu

_LANE = 128


def _round_up(n, m):
    return -(-n // m) * m


def _pad2(a, shape, value):
    pads = tuple((0, s - d) for d, s in zip(a.shape, shape))
    if not any(p[1] for p in pads):
        return a
    return jnp.pad(a, pads, constant_values=value)


def _prepare_padded_params(params, use_b_norm):
    """Pad every feature dim to a multiple of 128 (lane-dense blocks) and cast
    weights to bf16 (MXU operands / halved HBM weight reads)."""
    weights, biases = params["weights"], params["biases"]
    gammas, betas = params.get("gammas", []), params.get("betas", [])
    n_layers = len(weights)
    dims = [weights[0].shape[0]] + [w.shape[1] for w in weights]
    dims_p = [_round_up(d, _LANE) for d in dims]
    ws, bs, gs, bts = [], [], [], []
    for d in range(n_layers):
        ws.append(_pad2(weights[d].astype(jnp.float32),
                        (dims_p[d], dims_p[d + 1]), 0.0).astype(jnp.bfloat16))
        bs.append(_pad2(jnp.reshape(biases[d], (1, -1)).astype(jnp.float32),
                        (1, dims_p[d + 1]), 0.0))
        if use_b_norm and d < n_layers - 1:
            gs.append(_pad2(jnp.reshape(gammas[d], (1, -1)).astype(jnp.float32),
                            (1, dims_p[d + 1]), 1.0))
            bts.append(_pad2(jnp.reshape(betas[d], (1, -1)).astype(jnp.float32),
                             (1, dims_p[d + 1]), 0.0))
    return dims, dims_p, ws, bs, gs, bts


# ----------------------------------------------------------------------------
# Fused path: whole batch + all weights resident in VMEM, one pallas_call.
# ----------------------------------------------------------------------------
def _fused_kernel(*refs, n_rows, n_layers, use_b_norm, use_relu, closure_relu,
                  eps):
    it = iter(refs)
    x_ref = next(it)
    ws = [next(it) for _ in range(n_layers)]
    bs = [next(it) for _ in range(n_layers)]
    gs, bts = (), ()
    if use_b_norm:
        gs = [next(it) for _ in range(n_layers - 1)]
        bts = [next(it) for _ in range(n_layers - 1)]
    o_ref = next(it)

    rows_p = x_ref.shape[0]
    valid = jax.lax.broadcasted_iota(jnp.int32, (rows_p, 1), 0) < n_rows
    inv_n = jnp.float32(1.0 / n_rows)

    h = x_ref[...].astype(jnp.float32)
    for d in range(n_layers):
        # bf16 MXU operands, f32 accumulation.
        y = jnp.dot(h.astype(jnp.bfloat16), ws[d][...],
                    preferred_element_type=jnp.float32) + bs[d][...]
        if d < n_layers - 1:
            if use_b_norm:
                ym = jnp.where(valid, y, 0.0)          # exclude padding rows
                mean = jnp.sum(ym, axis=0, keepdims=True) * inv_n
                var = jnp.maximum(
                    jnp.sum(ym * ym, axis=0, keepdims=True) * inv_n
                    - mean * mean, 0.0)
                scale = gs[d][...] * jax.lax.rsqrt(var + eps)
                y = (y - mean) * scale + bts[d][...]
            if use_relu:
                y = jnp.maximum(y, 0.0)
        h = y
    if closure_relu:
        h = jnp.maximum(h, 0.0)
    o_ref[...] = h.astype(o_ref.dtype)


# ----------------------------------------------------------------------------
# Tiled path: one row-tiled pallas_call per Linear layer.
# ----------------------------------------------------------------------------
def _tiled_layer_kernel(*refs, n_rows, tile_r, tiles_per_split, bn_in, act_in,
                        acc_stats, closure_relu):
    it = iter(refs)
    x_ref = next(it)
    if bn_in:
        scale_ref = next(it)
        shift_ref = next(it)
    w_ref = next(it)
    b_ref = next(it)
    y_ref = next(it)
    if acc_stats:
        sum_ref = next(it)
        sq_ref = next(it)

    if bn_in or act_in:
        x = x_ref[...].astype(jnp.float32)
        if bn_in:
            # Pre-folded full-batch BatchNorm affine (scale, shift).
            x = x * scale_ref[...] + shift_ref[...]
        if act_in:
            x = jnp.maximum(x, 0.0)
        x = x.astype(jnp.bfloat16)
    else:
        x = x_ref[...]

    # bf16 MXU operands, f32 accumulation.
    y = jnp.dot(x, w_ref[...], preferred_element_type=jnp.float32) + b_ref[...]
    if closure_relu:
        y = jnp.maximum(y, 0.0)
    y_ref[...] = y.astype(y_ref.dtype)

    if acc_stats:
        s = pl.program_id(0)
        i = pl.program_id(1)

        @pl.when(i == 0)
        def _():
            sum_ref[...] = jnp.zeros_like(sum_ref)
            sq_ref[...] = jnp.zeros_like(sq_ref)

        row0 = (s * tiles_per_split + i) * tile_r
        is_full = row0 + tile_r <= n_rows

        @pl.when(is_full)
        def _():
            sum_ref[...] += jnp.sum(y, axis=0, keepdims=True)[None]
            sq_ref[...] += jnp.sum(y * y, axis=0, keepdims=True)[None]

        @pl.when(jnp.logical_not(is_full))
        def _():
            rows = row0 + jax.lax.broadcasted_iota(jnp.int32, (tile_r, 1), 0)
            ym = jnp.where(rows < n_rows, y, 0.0)
            sum_ref[...] += jnp.sum(ym, axis=0, keepdims=True)[None]
            sq_ref[...] += jnp.sum(ym * ym, axis=0, keepdims=True)[None]


def _tiled_layer(x, w, b, scale, shift, *, n_rows, tile_r, n_splits,
                 tiles_per_split, bn_in, act_in, acc_stats, closure_relu,
                 out_dtype):
    rows_p, c_in = x.shape
    c_out = w.shape[1]
    grid = (n_splits, tiles_per_split)

    def row_map(s, i):
        return (s * tiles_per_split + i, 0)

    def rep_map(s, i):
        return (0, 0)

    in_specs = [pl.BlockSpec((tile_r, c_in), row_map)]
    args = [x]
    if bn_in:
        in_specs += [pl.BlockSpec((1, c_in), rep_map),
                     pl.BlockSpec((1, c_in), rep_map)]
        args += [scale, shift]
    in_specs += [pl.BlockSpec((c_in, c_out), rep_map),
                 pl.BlockSpec((1, c_out), rep_map)]
    args += [w, b]

    y_spec = pl.BlockSpec((tile_r, c_out), row_map)
    y_shape = jax.ShapeDtypeStruct((rows_p, c_out), out_dtype)
    if acc_stats:
        # One partial-stats accumulator row per split; the split axis stays
        # "parallel" so v7x's two TensorCores both run this layer.
        st_spec = pl.BlockSpec((1, 1, c_out), lambda s, i: (s, 0, 0))
        st_shape = jax.ShapeDtypeStruct((n_splits, 1, c_out), jnp.float32)
        out_specs = (y_spec, st_spec, st_spec)
        out_shape = (y_shape, st_shape, st_shape)
        sem = ("parallel", "arbitrary")
    else:
        out_specs = y_spec
        out_shape = y_shape
        sem = ("parallel", "parallel")

    kernel = functools.partial(
        _tiled_layer_kernel, n_rows=n_rows, tile_r=tile_r,
        tiles_per_split=tiles_per_split, bn_in=bn_in, act_in=act_in,
        acc_stats=acc_stats, closure_relu=closure_relu)

    return pl.pallas_call(
        kernel, grid=grid, in_specs=in_specs, out_specs=out_specs,
        out_shape=out_shape,
        compiler_params=pltpu.CompilerParams(dimension_semantics=sem),
    )(*args)


# ----------------------------------------------------------------------------
# Top-level forward.
# ----------------------------------------------------------------------------
def mlp_decoder_forward(x, params, *, use_b_norm=True, use_relu=True,
                        closure_relu=False, tile_r=2048, eps=1e-5, mode="auto"):
    """MLPDecoder.forward: [Linear -> (BN) -> (ReLU)] * (L-1) -> Linear (-> closure)."""
    n_rows, in_feat = x.shape
    dims, dims_p, ws, bs, gs, bts = _prepare_padded_params(params, use_b_norm)
    assert in_feat == dims[0]
    n_layers = len(ws)
    c_last = dims[-1]

    rows_p8 = _round_up(n_rows, 8)
    max_dim_p = max(dims_p)
    fused_bytes = 4 * rows_p8 * max_dim_p * 4 + sum(w.size * 2 for w in ws)
    use_fused = (mode == "fused") or (mode == "auto"
                                      and fused_bytes <= 8 * 1024 * 1024)

    if use_fused:
        x_p = _pad2(x.astype(jnp.float32), (rows_p8, dims_p[0]), 0.0)
        kernel = functools.partial(
            _fused_kernel, n_rows=n_rows, n_layers=n_layers,
            use_b_norm=use_b_norm, use_relu=use_relu,
            closure_relu=closure_relu, eps=eps)
        out = pl.pallas_call(
            kernel,
            out_shape=jax.ShapeDtypeStruct((rows_p8, dims_p[-1]), jnp.float32),
        )(x_p, *ws, *bs, *gs, *bts)
        return out[:n_rows, :c_last]

    # ---- tiled per-layer path (large batches) ----
    tile_r = max(16, min(_round_up(int(tile_r), 16), _round_up(n_rows, 16)))
    total_tiles = -(-n_rows // tile_r)
    n_splits = 2 if total_tiles >= 2 else 1
    total_tiles = _round_up(total_tiles, n_splits)
    tiles_per_split = total_tiles // n_splits
    rows_p = total_tiles * tile_r

    h = _pad2(x.astype(jnp.float32), (rows_p, dims_p[0]), 0.0).astype(jnp.bfloat16)
    scale = shift = None
    for d in range(n_layers):
        is_last = d == n_layers - 1
        bn_in = use_b_norm and d > 0
        act_in = use_relu and d > 0
        acc_stats = use_b_norm and not is_last
        outs = _tiled_layer(
            h, ws[d], bs[d], scale, shift,
            n_rows=n_rows, tile_r=tile_r, n_splits=n_splits,
            tiles_per_split=tiles_per_split, bn_in=bn_in, act_in=act_in,
            acc_stats=acc_stats, closure_relu=(is_last and closure_relu),
            out_dtype=jnp.float32 if is_last else jnp.bfloat16)
        if acc_stats:
            h, s1, s2 = outs
            # Fold full-batch BN (training-mode, biased var) into one affine;
            # tiny (1, c) XLA ops between the per-layer pallas_calls.
            inv_n = 1.0 / n_rows
            mean = jnp.sum(s1, axis=0) * inv_n                       # (1, c)
            var = jnp.maximum(jnp.sum(s2, axis=0) * inv_n - mean * mean, 0.0)
            scale = gs[d] * jax.lax.rsqrt(var + eps)
            shift = bts[d] - mean * scale
        else:
            h = outs
            scale = shift = None
    return h[:n_rows, :c_last]


# ------------------------------------------------------------------
# Pure-JAX reference (PyTorch semantics: training-mode BN, biased variance).
# ------------------------------------------------------------------
def _reference(x, params, *, use_b_norm=True, use_relu=True,
               closure_relu=False, eps=1e-5):
    weights, biases = params["weights"], params["biases"]
    gammas, betas = params.get("gammas", []), params.get("betas", [])
    n_layers = len(weights)
    h = x.astype(jnp.float32)
    for d in range(n_layers):
        h = h @ weights[d] + biases[d]
        if d < n_layers - 1:
            if use_b_norm:
                mean = jnp.mean(h, axis=0, keepdims=True)
                var = jnp.mean((h - mean) ** 2, axis=0, keepdims=True)
                h = (h - mean) / jnp.sqrt(var + eps) * gammas[d] + betas[d]
            if use_relu:
                h = jnp.maximum(h, 0.0)
    if closure_relu:
        h = jnp.maximum(h, 0.0)
    return h


def make_params(key, in_feat_dims, out_channels):
    dims = (in_feat_dims,) + tuple(out_channels)
    n_layers = len(out_channels)
    keys = jax.random.split(key, 4 * n_layers)
    weights, biases, gammas, betas = [], [], [], []
    for d in range(n_layers):
        kw, kb, kg, kbt = keys[4 * d:4 * d + 4]
        bound = float(dims[d]) ** -0.5          # ~ PyTorch default Linear init range
        weights.append(jax.random.uniform(
            kw, (dims[d], dims[d + 1]), jnp.float32, -bound, bound))
        biases.append(jax.random.uniform(
            kb, (1, dims[d + 1]), jnp.float32, -bound, bound))
        if d < n_layers - 1:
            gammas.append(1.0 + 0.1 * jax.random.normal(kg, (1, dims[d + 1]), jnp.float32))
            betas.append(0.1 * jax.random.normal(kbt, (1, dims[d + 1]), jnp.float32))
    return {"weights": weights, "biases": biases, "gammas": gammas, "betas": betas}


if __name__ == "__main__":
    # MLPDecoder(in_feat_dims=256, out_channels=[128, 128, 64], use_b_norm=True,
    # non_linearity=ReLU, closure=None) on a batch of 200 rows.
    N, in_feat_dims = 200, 256
    out_channels = (128, 128, 64)

    key = jax.random.PRNGKey(0)
    kx, kp = jax.random.split(key)
    x = jax.random.normal(kx, (N, in_feat_dims), jnp.float32)
    params = make_params(kp, in_feat_dims, out_channels)
    ref = _reference(x, params)

    # Fused path (whole batch + weights VMEM-resident, single pallas_call).
    fused_fwd = jax.jit(functools.partial(mlp_decoder_forward, mode="fused"))
    y_fused = jax.block_until_ready(fused_fwd(x, params))

    # Tiled per-layer path; small tile_r exercises the multi-tile grid, the
    # per-split stats accumulators and the edge-tile masking.
    tiled_fwd = jax.jit(functools.partial(mlp_decoder_forward, mode="tiled",
                                          tile_r=64))
    y_tiled = jax.block_until_ready(tiled_fwd(x, params))

    for name, y in (("fused", y_fused), ("tiled", y_tiled)):
        assert y.shape == (N, out_channels[-1]), (name, y.shape)
        assert not bool(jnp.any(jnp.isnan(y))), name
        err = float(jnp.max(jnp.abs(y - ref)))
        # bf16 MXU operands / bf16 inter-layer activations => relaxed tolerance.
        assert jnp.allclose(y, ref, atol=8e-2, rtol=8e-2), (name, err)
    print("KERNEL_OK")
</pallas_src>

<mosaic_0001>
module attributes {stable_mosaic.version = 11 : i64} {
  func.func @_fused_kernel(%arg0: memref<200x256xf32, #tpu.memory_space<vmem>>, %arg1: memref<256x128xbf16, #tpu.memory_space<vmem>>, %arg2: memref<128x128xbf16, #tpu.memory_space<vmem>>, %arg3: memref<128x128xbf16, #tpu.memory_space<vmem>>, %arg4: memref<1x128xf32, #tpu.memory_space<vmem>>, %arg5: memref<1x128xf32, #tpu.memory_space<vmem>>, %arg6: memref<1x128xf32, #tpu.memory_space<vmem>>, %arg7: memref<1x128xf32, #tpu.memory_space<vmem>>, %arg8: memref<1x128xf32, #tpu.memory_space<vmem>>, %arg9: memref<1x128xf32, #tpu.memory_space<vmem>>, %arg10: memref<1x128xf32, #tpu.memory_space<vmem>>, %arg11: memref<200x128xf32, #tpu.memory_space<vmem>>) attributes {dimension_semantics = [], scalar_prefetch = 0 : i64, scratch_operands = 0 : i64, tpu.core_type = #tpu.core_type<tc>} {
    %0 = tpu.iota {dimensions = array<i32: 0>} : vector<200x1xi32>
    %c200_i32 = arith.constant 200 : i32
    %1 = vector.broadcast %c200_i32 : i32 to vector<200x1xi32>
    %2 = arith.cmpi slt, %0, %1 : vector<200x1xi32>
    %c0 = arith.constant 0 : index
    %c0_0 = arith.constant 0 : index
    %3 = vector.load %arg0[%c0, %c0_0] : memref<200x256xf32, #tpu.memory_space<vmem>>, vector<200x256xf32>
    %4 = arith.truncf %3 : vector<200x256xf32> to vector<200x256xbf16>
    %c0_1 = arith.constant 0 : index
    %c0_2 = arith.constant 0 : index
    %5 = vector.load %arg1[%c0_1, %c0_2] : memref<256x128xbf16, #tpu.memory_space<vmem>>, vector<256x128xbf16>
    %cst = arith.constant dense<0.000000e+00> : vector<200x128xf32>
    %6 = tpu.matmul %4, %5, %cst {dimension_numbers = #tpu.dot_dimension_numbers<[1], [0], [0], [1], [0, 0, 1, 1], [], []>} : vector<200x256xbf16>, vector<256x128xbf16>, vector<200x128xf32> -> vector<200x128xf32>
    %c0_3 = arith.constant 0 : index
    %c0_4 = arith.constant 0 : index
    %7 = vector.load %arg4[%c0_3, %c0_4] : memref<1x128xf32, #tpu.memory_space<vmem>>, vector<1x128xf32>
    %8 = vector.broadcast %7 : vector<1x128xf32> to vector<200x128xf32>
    %9 = arith.addf %6, %8 : vector<200x128xf32>
    %cst_5 = arith.constant 0.000000e+00 : f32
    %10 = vector.shape_cast %2 : vector<200x1xi1> to vector<200x1xi1>
    %11 = vector.broadcast %10 : vector<200x1xi1> to vector<200x128xi1>
    %12 = vector.broadcast %cst_5 : f32 to vector<200x128xf32>
    %13 = arith.select %11, %9, %12 : vector<200x128xi1>, vector<200x128xf32>
    %cst_6 = arith.constant dense<0.000000e+00> : vector<128xf32>
    %14 = vector.multi_reduction <add>, %13, %cst_6 [0] : vector<200x128xf32> to vector<128xf32>
    %15 = vector.shape_cast %14 : vector<128xf32> to vector<1x128xf32>
    %cst_7 = arith.constant 5.000000e-03 : f32
    %16 = vector.broadcast %cst_7 : f32 to vector<1x128xf32>
    %17 = arith.mulf %15, %16 : vector<1x128xf32>
    %18 = arith.mulf %13, %13 : vector<200x128xf32>
    %cst_8 = arith.constant dense<0.000000e+00> : vector<128xf32>
    %19 = vector.multi_reduction <add>, %18, %cst_8 [0] : vector<200x128xf32> to vector<128xf32>
    %20 = vector.shape_cast %19 : vector<128xf32> to vector<1x128xf32>
    %cst_9 = arith.constant 5.000000e-03 : f32
    %21 = vector.broadcast %cst_9 : f32 to vector<1x128xf32>
    %22 = arith.mulf %20, %21 : vector<1x128xf32>
    %23 = arith.mulf %17, %17 : vector<1x128xf32>
    %24 = arith.subf %22, %23 : vector<1x128xf32>
    %cst_10 = arith.constant 0.000000e+00 : f32
    %25 = vector.broadcast %cst_10 : f32 to vector<1x128xf32>
    %26 = arith.maximumf %24, %25 : vector<1x128xf32>
    %c0_11 = arith.constant 0 : index
    %c0_12 = arith.constant 0 : index
    %27 = vector.load %arg7[%c0_11, %c0_12] : memref<1x128xf32, #tpu.memory_space<vmem>>, vector<1x128xf32>
    %cst_13 = arith.constant 9.99999974E-6 : f32
    %28 = vector.broadcast %cst_13 : f32 to vector<1x128xf32>
    %29 = arith.addf %26, %28 : vector<1x128xf32>
    %30 = math.rsqrt %29 : vector<1x128xf32>
    %31 = arith.mulf %27, %30 : vector<1x128xf32>
    %32 = vector.broadcast %17 : vector<1x128xf32> to vector<200x128xf32>
    %33 = arith.subf %9, %32 : vector<200x128xf32>
    %34 = vector.broadcast %31 : vector<1x128xf32> to vector<200x128xf32>
    %35 = arith.mulf %33, %34 : vector<200x128xf32>
    %c0_14 = arith.constant 0 : index
    %c0_15 = arith.constant 0 : index
    %36 = vector.load %arg9[%c0_14, %c0_15] : memref<1x128xf32, #tpu.memory_space<vmem>>, vector<1x128xf32>
    %37 = vector.broadcast %36 : vector<1x128xf32> to vector<200x128xf32>
    %38 = arith.addf %35, %37 : vector<200x128xf32>
    %cst_16 = arith.constant 0.000000e+00 : f32
    %39 = vector.broadcast %cst_16 : f32 to vector<200x128xf32>
    %40 = arith.maximumf %38, %39 : vector<200x128xf32>
    %41 = arith.truncf %40 : vector<200x128xf32> to vector<200x128xbf16>
    %c0_17 = arith.constant 0 : index
    %c0_18 = arith.constant 0 : index
    %42 = vector.load %arg2[%c0_17, %c0_18] : memref<128x128xbf16, #tpu.memory_space<vmem>>, vector<128x128xbf16>
    %cst_19 = arith.constant dense<0.000000e+00> : vector<200x128xf32>
    %43 = tpu.matmul %41, %42, %cst_19 {dimension_numbers = #tpu.dot_dimension_numbers<[1], [0], [0], [1], [0, 0, 1, 1], [], []>} : vector<200x128xbf16>, vector<128x128xbf16>, vector<200x128xf32> -> vector<200x128xf32>
    %c0_20 = arith.constant 0 : index
    %c0_21 = arith.constant 0 : index
    %44 = vector.load %arg5[%c0_20, %c0_21] : memref<1x128xf32, #tpu.memory_space<vmem>>, vector<1x128xf32>
    %45 = vector.broadcast %44 : vector<1x128xf32> to vector<200x128xf32>
    %46 = arith.addf %43, %45 : vector<200x128xf32>
    %cst_22 = arith.constant 0.000000e+00 : f32
    %47 = vector.shape_cast %2 : vector<200x1xi1> to vector<200x1xi1>
    %48 = vector.broadcast %47 : vector<200x1xi1> to vector<200x128xi1>
    %49 = vector.broadcast %cst_22 : f32 to vector<200x128xf32>
    %50 = arith.select %48, %46, %49 : vector<200x128xi1>, vector<200x128xf32>
    %cst_23 = arith.constant dense<0.000000e+00> : vector<128xf32>
    %51 = vector.multi_reduction <add>, %50, %cst_23 [0] : vector<200x128xf32> to vector<128xf32>
    %52 = vector.shape_cast %51 : vector<128xf32> to vector<1x128xf32>
    %cst_24 = arith.constant 5.000000e-03 : f32
    %53 = vector.broadcast %cst_24 : f32 to vector<1x128xf32>
    %54 = arith.mulf %52, %53 : vector<1x128xf32>
    %55 = arith.mulf %50, %50 : vector<200x128xf32>
    %cst_25 = arith.constant dense<0.000000e+00> : vector<128xf32>
    %56 = vector.multi_reduction <add>, %55, %cst_25 [0] : vector<200x128xf32> to vector<128xf32>
    %57 = vector.shape_cast %56 : vector<128xf32> to vector<1x128xf32>
    %cst_26 = arith.constant 5.000000e-03 : f32
    %58 = vector.broadcast %cst_26 : f32 to vector<1x128xf32>
    %59 = arith.mulf %57, %58 : vector<1x128xf32>
    %60 = arith.mulf %54, %54 : vector<1x128xf32>
    %61 = arith.subf %59, %60 : vector<1x128xf32>
    %cst_27 = arith.constant 0.000000e+00 : f32
    %62 = vector.broadcast %cst_27 : f32 to vector<1x128xf32>
    %63 = arith.maximumf %61, %62 : vector<1x128xf32>
    %c0_28 = arith.constant 0 : index
    %c0_29 = arith.constant 0 : index
    %64 = vector.load %arg8[%c0_28, %c0_29] : memref<1x128xf32, #tpu.memory_space<vmem>>, vector<1x128xf32>
    %cst_30 = arith.constant 9.99999974E-6 : f32
    %65 = vector.broadcast %cst_30 : f32 to vector<1x128xf32>
    %66 = arith.addf %63, %65 : vector<1x128xf32>
    %67 = math.rsqrt %66 : vector<1x128xf32>
    %68 = arith.mulf %64, %67 : vector<1x128xf32>
    %69 = vector.broadcast %54 : vector<1x128xf32> to vector<200x128xf32>
    %70 = arith.subf %46, %69 : vector<200x128xf32>
    %71 = vector.broadcast %68 : vector<1x128xf32> to vector<200x128xf32>
    %72 = arith.mulf %70, %71 : vector<200x128xf32>
    %c0_31 = arith.constant 0 : index
    %c0_32 = arith.constant 0 : index
    %73 = vector.load %arg10[%c0_31, %c0_32] : memref<1x128xf32, #tpu.memory_space<vmem>>, vector<1x128xf32>
    %74 = vector.broadcast %73 : vector<1x128xf32> to vector<200x128xf32>
    %75 = arith.addf %72, %74 : vector<200x128xf32>
    %cst_33 = arith.constant 0.000000e+00 : f32
    %76 = vector.broadcast %cst_33 : f32 to vector<200x128xf32>
    %77 = arith.maximumf %75, %76 : vector<200x128xf32>
    %78 = arith.truncf %77 : vector<200x128xf32> to vector<200x128xbf16>
    %c0_34 = arith.constant 0 : index
    %c0_35 = arith.constant 0 : index
    %79 = vector.load %arg3[%c0_34, %c0_35] : memref<128x128xbf16, #tpu.memory_space<vmem>>, vector<128x128xbf16>
    %cst_36 = arith.constant dense<0.000000e+00> : vector<200x128xf32>
    %80 = tpu.matmul %78, %79, %cst_36 {dimension_numbers = #tpu.dot_dimension_numbers<[1], [0], [0], [1], [0, 0, 1, 1], [], []>} : vector<200x128xbf16>, vector<128x128xbf16>, vector<200x128xf32> -> vector<200x128xf32>
    %c0_37 = arith.constant 0 : index
    %c0_38 = arith.constant 0 : index
    %81 = vector.load %arg6[%c0_37, %c0_38] : memref<1x128xf32, #tpu.memory_space<vmem>>, vector<1x128xf32>
    %82 = vector.broadcast %81 : vector<1x128xf32> to vector<200x128xf32>
    %83 = arith.addf %80, %82 : vector<200x128xf32>
    %c0_39 = arith.constant 0 : index
    %c0_40 = arith.constant 0 : index
    %84 = vector.load %arg11[%c0_39, %c0_40] : memref<200x128xf32, #tpu.memory_space<vmem>>, vector<200x128xf32>
    tpu.vector_store %arg11[%c0_39, %c0_40], %83 {strides = array<i32>} : memref<200x128xf32, #tpu.memory_space<vmem>>, vector<200x128xf32>,
    return
  }
}

</mosaic_0001>

<llo_original>
// kernel: mlp_decoder_forward.1
$region0: #{mlp_decoder_forward.1}
  #allocation0 [shape = 'u32[]', space=smem, size = 0x4, offset = 0x4, fixed_abs, tag = 'smem constant byte address 0x4 - core index']
  #allocation1 [shape = 'u32[144,128]{1,0:T(1,128)}', space=vmem, size = 0x12000, scoped, tag = 'internal scratch']
  %s0 = inlined_call_operand.vmem [shape: f32[200,256], index: 0, kind: input, shape index: {}]
  %s1 = inlined_call_operand.vmem [shape: bf16[256,128], index: 1, kind: input, shape index: {}]
  %s2 = inlined_call_operand.vmem [shape: bf16[128,128], index: 2, kind: input, shape index: {}]
  %s3 = inlined_call_operand.vmem [shape: bf16[128,128], index: 3, kind: input, shape index: {}]
  %s4 = inlined_call_operand.vmem [shape: f32[1,128], index: 4, kind: input, shape index: {}]
  %s5 = inlined_call_operand.vmem [shape: f32[1,128], index: 5, kind: input, shape index: {}]
  %s6 = inlined_call_operand.vmem [shape: f32[1,128], index: 6, kind: input, shape index: {}]
  %s7 = inlined_call_operand.vmem [shape: f32[1,128], index: 7, kind: input, shape index: {}]
  %s8 = inlined_call_operand.vmem [shape: f32[1,128], index: 8, kind: input, shape index: {}]
  %s9 = inlined_call_operand.vmem [shape: f32[1,128], index: 9, kind: input, shape index: {}]
  %s10 = inlined_call_operand.vmem [shape: f32[1,128], index: 10, kind: input, shape index: {}]
  %s11 = inlined_call_operand.vmem [shape: f32[200,128], index: 11, kind: output, shape index: {}]
  %s12 = sld [smem:[#allocation0]]
  $region54: #{mlp_decoder_forward.1} parent=0
    _
  %s14 = ssub.s32 1, %s12
  %s15 = scalar_select 0, %s14, %s12
  // Predicated region
  $region2: #{mlp_decoder_forward.1} parent=0 // pred_check
    _
  $region3: #{mlp_decoder_forward.1} parent=0 // pred_check_branch
    %17 = sbr.rel (0) target = $region5
  $region4: #{mlp_decoder_forward.1} parent=0 // pred_region
    _
  $region5: #{mlp_decoder_forward.1} parent=0 // pred_fallthru
    _
  // Predicated region
  $region6: #{mlp_decoder_forward.1} parent=0 // pred_check
    _
  $region7: #{mlp_decoder_forward.1} parent=0 // pred_check_branch
    %19 = sbr.rel (0) target = $region9
  $region8: #{mlp_decoder_forward.1} parent=0 // pred_region
    _
  $region9: #{mlp_decoder_forward.1} parent=0 // pred_fallthru
    _
  // Predicated region
  $region10: #{mlp_decoder_forward.1} parent=0 // pred_check
    _
  $region11: #{mlp_decoder_forward.1} parent=0 // pred_check_branch
    %21 = sbr.rel (0) target = $region13
  $region12: #{mlp_decoder_forward.1} parent=0 // pred_region
    _
  $region13: #{mlp_decoder_forward.1} parent=0 // pred_fallthru
    _
  // Predicated region
  $region14: #{mlp_decoder_forward.1} parent=0 // pred_check
    _
  $region15: #{mlp_decoder_forward.1} parent=0 // pred_check_branch
    %23 = sbr.rel (0) target = $region17
  $region16: #{mlp_decoder_forward.1} parent=0 // pred_region
    _
  $region17: #{mlp_decoder_forward.1} parent=0 // pred_fallthru
    _
  // Predicated region
  $region18: #{mlp_decoder_forward.1} parent=0 // pred_check
    _
  $region19: #{mlp_decoder_forward.1} parent=0 // pred_check_branch
    %25 = sbr.rel (0) target = $region21
  $region20: #{mlp_decoder_forward.1} parent=0 // pred_region
    _
  $region21: #{mlp_decoder_forward.1} parent=0 // pred_fallthru
    _
  // Predicated region
  $region22: #{mlp_decoder_forward.1} parent=0 // pred_check
    _
  $region23: #{mlp_decoder_forward.1} parent=0 // pred_check_branch
    %27 = sbr.rel (0) target = $region25
  $region24: #{mlp_decoder_forward.1} parent=0 // pred_region
    _
  $region25: #{mlp_decoder_forward.1} parent=0 // pred_fallthru
    _
  // Predicated region
  $region26: #{mlp_decoder_forward.1} parent=0 // pred_check
    _
  $region27: #{mlp_decoder_forward.1} parent=0 // pred_check_branch
    %29 = sbr.rel (0) target = $region29
  $region28: #{mlp_decoder_forward.1} parent=0 // pred_region
    _
  $region29: #{mlp_decoder_forward.1} parent=0 // pred_fallthru
    _
  // Predicated region
  $region30: #{mlp_decoder_forward.1} parent=0 // pred_check
    _
  $region31: #{mlp_decoder_forward.1} parent=0 // pred_check_branch
    %31 = sbr.rel (0) target = $region33
  $region32: #{mlp_decoder_forward.1} parent=0 // pred_region
    _
  $region33: #{mlp_decoder_forward.1} parent=0 // pred_fallthru
    _
  // Predicated region
  $region34: #{mlp_decoder_forward.1} parent=0 // pred_check
    _
  $region35: #{mlp_decoder_forward.1} parent=0 // pred_check_branch
    %33 = sbr.rel (0) target = $region37
  $region36: #{mlp_decoder_forward.1} parent=0 // pred_region
    _
  $region37: #{mlp_decoder_forward.1} parent=0 // pred_fallthru
    _
  // Predicated region
  $region38: #{mlp_decoder_forward.1} parent=0 // pred_check
    _
  $region39: #{mlp_decoder_forward.1} parent=0 // pred_check_branch
    %35 = sbr.rel (0) target = $region41
  $region40: #{mlp_decoder_forward.1} parent=0 // pred_region
    _
  $region41: #{mlp_decoder_forward.1} parent=0 // pred_fallthru
    _
  // Predicated region
  $region42: #{mlp_decoder_forward.1} parent=0 // pred_check
    _
  $region43: #{mlp_decoder_forward.1} parent=0 // pred_check_branch
    %37 = sbr.rel (0) target = $region45
  $region44: #{mlp_decoder_forward.1} parent=0 // pred_region
    _
  $region45: #{mlp_decoder_forward.1} parent=0 // pred_fallthru
    _
  %v39 = vlaneseq
  %v40 = vshrl.u32 %v39, 7
  %v41 = vadd.s32 %v40, 8
  %v42 = vadd.s32 %v40, 16
  %v43 = vadd.s32 %v40, 24
  %v44 = vadd.s32 %v40, 32
  %v45 = vadd.s32 %v40, 40
  %v46 = vadd.s32 %v40, 48
  %v47 = vadd.s32 %v40, 56
  %v48 = vadd.s32 %v40, 64
  %v49 = vadd.s32 %v40, 72
  %v50 = vadd.s32 %v40, 80
  %v51 = vadd.s32 %v40, 88
  %v52 = vadd.s32 %v40, 96
  %v53 = vadd.s32 %v40, 104
  %v54 = vadd.s32 %v40, 112
  %v55 = vadd.s32 %v40, 120
  %v56 = vadd.s32 %v40, 128
  %v57 = vadd.s32 %v40, 136
  %v58 = vadd.s32 %v40, 144
  %v59 = vadd.s32 %v40, 152
  %v60 = vadd.s32 %v40, 160
  %v61 = vadd.s32 %v40, 168
  %v62 = vadd.s32 %v40, 176
  %v63 = vadd.s32 %v40, 184
  %v64 = vadd.s32 %v40, 192
  %vm65 = vcmp.lt.s32.totalorder %v40, 200
  %vm66 = vcmp.lt.s32.totalorder %v41, 200
  %vm67 = vcmp.lt.s32.totalorder %v42, 200
  %vm68 = vcmp.lt.s32.totalorder %v43, 200
  %vm69 = vcmp.lt.s32.totalorder %v44, 200
  %vm70 = vcmp.lt.s32.totalorder %v45, 200
  %vm71 = vcmp.lt.s32.totalorder %v46, 200
  %vm72 = vcmp.lt.s32.totalorder %v47, 200
  %vm73 = vcmp.lt.s32.totalorder %v48, 200
  %vm74 = vcmp.lt.s32.totalorder %v49, 200
  %vm75 = vcmp.lt.s32.totalorder %v50, 200
  %vm76 = vcmp.lt.s32.totalorder %v51, 200
  %vm77 = vcmp.lt.s32.totalorder %v52, 200
  %vm78 = vcmp.lt.s32.totalorder %v53, 200
  %vm79 = vcmp.lt.s32.totalorder %v54, 200
  %vm80 = vcmp.lt.s32.totalorder %v55, 200
  %vm81 = vcmp.lt.s32.totalorder %v56, 200
  %vm82 = vcmp.lt.s32.totalorder %v57, 200
  %vm83 = vcmp.lt.s32.totalorder %v58, 200
  %vm84 = vcmp.lt.s32.totalorder %v59, 200
  %vm85 = vcmp.lt.s32.totalorder %v60, 200
  %vm86 = vcmp.lt.s32.totalorder %v61, 200
  %vm87 = vcmp.lt.s32.totalorder %v62, 200
  %vm88 = vcmp.lt.s32.totalorder %v63, 200
  %vm89 = vcmp.lt.s32.totalorder %v64, 200
  %v90 = vld [vmem:[%s0] sm:$0xff]
  %v91 = vld [vmem:[%s0 + $0x8] sm:$0xff]
  %v92 = vld [vmem:[%s0 + $0x10] sm:$0xff]
  %v93 = vld [vmem:[%s0 + $0x18] sm:$0xff]
  %v94 = vld [vmem:[%s0 + $0x20] sm:$0xff]
  %v95 = vld [vmem:[%s0 + $0x28] sm:$0xff]
  %v96 = vld [vmem:[%s0 + $0x30] sm:$0xff]
  %v97 = vld [vmem:[%s0 + $0x38] sm:$0xff]
  %v98 = vld [vmem:[%s0 + $0x40] sm:$0xff]
  %v99 = vld [vmem:[%s0 + $0x48] sm:$0xff]
  %v100 = vld [vmem:[%s0 + $0x50] sm:$0xff]
  %v101 = vld [vmem:[%s0 + $0x58] sm:$0xff]
  %v102 = vld [vmem:[%s0 + $0x60] sm:$0xff]
  %v103 = vld [vmem:[%s0 + $0x68] sm:$0xff]
  %v104 = vld [vmem:[%s0 + $0x70] sm:$0xff]
  %v105 = vld [vmem:[%s0 + $0x78] sm:$0xff]
  %v106 = vld [vmem:[%s0 + $0x80] sm:$0xff]
  %v107 = vld [vmem:[%s0 + $0x88] sm:$0xff]
  %v108 = vld [vmem:[%s0 + $0x90] sm:$0xff]
  %v109 = vld [vmem:[%s0 + $0x98] sm:$0xff]
  %v110 = vld [vmem:[%s0 + $0xa0] sm:$0xff]
  %v111 = vld [vmem:[%s0 + $0xa8] sm:$0xff]
  %v112 = vld [vmem:[%s0 + $0xb0] sm:$0xff]
  %v113 = vld [vmem:[%s0 + $0xb8] sm:$0xff]
  %v114 = vld [vmem:[%s0 + $0xc0] sm:$0xff]
  %v115 = vld [vmem:[%s0 + $0xc8] sm:$0xff]
  %v116 = vld [vmem:[%s0 + $0xd0] sm:$0xff]
  %v117 = vld [vmem:[%s0 + $0xd8] sm:$0xff]
  %v118 = vld [vmem:[%s0 + $0xe0] sm:$0xff]
  %v119 = vld [vmem:[%s0 + $0xe8] sm:$0xff]
  %v120 = vld [vmem:[%s0 + $0xf0] sm:$0xff]
  %v121 = vld [vmem:[%s0 + $0xf8] sm:$0xff]
  %v122 = vld [vmem:[%s0 + $0x100] sm:$0xff]
  %v123 = vld [vmem:[%s0 + $0x108] sm:$0xff]
  %v124 = vld [vmem:[%s0 + $0x110] sm:$0xff]
  %v125 = vld [vmem:[%s0 + $0x118] sm:$0xff]
  %v126 = vld [vmem:[%s0 + $0x120] sm:$0xff]
  %v127 = vld [vmem:[%s0 + $0x128] sm:$0xff]
  %v128 = vld [vmem:[%s0 + $0x130] sm:$0xff]
  %v129 = vld [vmem:[%s0 + $0x138] sm:$0xff]
  %v130 = vld [vmem:[%s0 + $0x140] sm:$0xff]
  %v131 = vld [vmem:[%s0 + $0x148] sm:$0xff]
  %v132 = vld [vmem:[%s0 + $0x150] sm:$0xff]
  %v133 = vld [vmem:[%s0 + $0x158] sm:$0xff]
  %v134 = vld [vmem:[%s0 + $0x160] sm:$0xff]
  %v135 = vld [vmem:[%s0 + $0x168] sm:$0xff]
  %v136 = vld [vmem:[%s0 + $0x170] sm:$0xff]
  %v137 = vld [vmem:[%s0 + $0x178] sm:$0xff]
  %v138 = vld [vmem:[%s0 + $0x180] sm:$0xff]
  %v139 = vld [vmem:[%s0 + $0x188] sm:$0xff]
  %v140 = vpack.c.bf16 %v92, %v90
  %v141 = vpack.c.bf16 %v93, %v91
  %v142 = vpack.c.bf16 %v96, %v94
  %v143 = vpack.c.bf16 %v97, %v95
  %v144 = vpack.c.bf16 %v100, %v98
  %v145 = vpack.c.bf16 %v101, %v99
  %v146 = vpack.c.bf16 %v104, %v102
  %v147 = vpack.c.bf16 %v105, %v103
  %v148 = vpack.c.bf16 %v108, %v106
  %v149 = vpack.c.bf16 %v109, %v107
  %v150 = vpack.c.bf16 %v112, %v110
  %v151 = vpack.c.bf16 %v113, %v111
  %v152 = vpack.c.bf16 %v116, %v114
  %v153 = vpack.c.bf16 %v117, %v115
  %v154 = vpack.c.bf16 %v120, %v118
  %v155 = vpack.c.bf16 %v121, %v119
  %v156 = vpack.c.bf16 %v124, %v122
  %v157 = vpack.c.bf16 %v125, %v123
  %v158 = vpack.c.bf16 %v128, %v126
  %v159 = vpack.c.bf16 %v129, %v127
  %v160 = vpack.c.bf16 %v132, %v130
  %v161 = vpack.c.bf16 %v133, %v131
  %v162 = vpack.c.bf16 %v136, %v134
  %v163 = vpack.c.bf16 %v137, %v135
  %v164 = vpack.c.bf16 %v138, %v138
  %v165 = vpack.c.bf16 %v139, %v139
  %v166 = vld [vmem:[%s1] sm:$0xf]
  %v167 = vld [vmem:[%s1 + $0x4] sm:$0xf]
  %v168 = vld [vmem:[%s1 + $0x8] sm:$0xf]
  %v169 = vld [vmem:[%s1 + $0xc] sm:$0xf]
  %v170 = vld [vmem:[%s1 + $0x10] sm:$0xf]
  %v171 = vld [vmem:[%s1 + $0x14] sm:$0xf]
  %v172 = vld [vmem:[%s1 + $0x18] sm:$0xf]
  %v173 = vld [vmem:[%s1 + $0x1c] sm:$0xf]
  %v174 = vld [vmem:[%s1 + $0x20] sm:$0xf]
  %v175 = vld [vmem:[%s1 + $0x24] sm:$0xf]
  %v176 = vld [vmem:[%s1 + $0x28] sm:$0xf]
  %v177 = vld [vmem:[%s1 + $0x2c] sm:$0xf]
  %v178 = vld [vmem:[%s1 + $0x30] sm:$0xf]
  %v179 = vld [vmem:[%s1 + $0x34] sm:$0xf]
  %v180 = vld [vmem:[%s1 + $0x38] sm:$0xf]
  %v181 = vld [vmem:[%s1 + $0x3c] sm:$0xf]
  %v182 = vld [vmem:[%s1 + $0x40] sm:$0xf]
  %v183 = vld [vmem:[%s1 + $0x44] sm:$0xf]
  %v184 = vld [vmem:[%s1 + $0x48] sm:$0xf]
  %v185 = vld [vmem:[%s1 + $0x4c] sm:$0xf]
  %v186 = vld [vmem:[%s1 + $0x50] sm:$0xf]
  %v187 = vld [vmem:[%s1 + $0x54] sm:$0xf]
  %v188 = vld [vmem:[%s1 + $0x58] sm:$0xf]
  %v189 = vld [vmem:[%s1 + $0x5c] sm:$0xf]
  %v190 = vld [vmem:[%s1 + $0x60] sm:$0xf]
  %v191 = vld [vmem:[%s1 + $0x64] sm:$0xf]
  %v192 = vld [vmem:[%s1 + $0x68] sm:$0xf]
  %v193 = vld [vmem:[%s1 + $0x6c] sm:$0xf]
  %v194 = vld [vmem:[%s1 + $0x70] sm:$0xf]
  %v195 = vld [vmem:[%s1 + $0x74] sm:$0xf]
  %v196 = vld [vmem:[%s1 + $0x78] sm:$0xf]
  %v197 = vld [vmem:[%s1 + $0x7c] sm:$0xf]
  %v198 = vld [vmem:[%s4] sm:$0x1]
  %v200 = vlaneseq
  %v201 = vshrl.u32 %v200, 7
  %v202 = vsub.s32 0, %v201
  %v203 = vrot.slane %v198, %v202
  %v237 = vunpack.c.l.b16 %v166
  %v238 = vunpack.c.l.b16 %v167
  %v239 = vunpack.c.l.b16 %v168
  %v240 = vunpack.c.l.b16 %v169
  %v241 = vunpack.c.l.b16 %v170
  %v242 = vunpack.c.l.b16 %v171
  %v243 = vunpack.c.l.b16 %v172
  %v244 = vunpack.c.l.b16 %v173
  %v245 = vunpack.c.l.b16 %v174
  %v246 = vunpack.c.l.b16 %v175
  %v247 = vunpack.c.l.b16 %v176
  %v248 = vunpack.c.l.b16 %v177
  %v249 = vunpack.c.l.b16 %v178
  %v250 = vunpack.c.l.b16 %v179
  %v251 = vunpack.c.l.b16 %v180
  %v252 = vunpack.c.l.b16 %v181
  %v253 = vunpack.c.l.b16 %v182
  %v254 = vunpack.c.l.b16 %v183
  %v255 = vunpack.c.l.b16 %v184
  %v256 = vunpack.c.l.b16 %v185
  %v257 = vunpack.c.l.b16 %v186
  %v258 = vunpack.c.l.b16 %v187
  %v259 = vunpack.c.l.b16 %v188
  %v260 = vunpack.c.l.b16 %v189
  %v261 = vunpack.c.l.b16 %v190
  %v262 = vunpack.c.l.b16 %v191
  %v263 = vunpack.c.l.b16 %v192
  %v264 = vunpack.c.l.b16 %v193
  %v265 = vunpack.c.l.b16 %v194
  %v266 = vunpack.c.l.b16 %v195
  %v267 = vunpack.c.l.b16 %v196
  %v268 = vunpack.c.l.b16 %v197
  %v269 = vpack.c.b16 %v238, %v237
  %v270 = vpack.c.b16 %v240, %v239
  %v271 = vpack.c.b16 %v242, %v241
  %v272 = vpack.c.b16 %v244, %v243
  %v273 = vpack.c.b16 %v246, %v245
  %v274 = vpack.c.b16 %v248, %v247
  %v275 = vpack.c.b16 %v250, %v249
  %v276 = vpack.c.b16 %v252, %v251
  %v277 = vpack.c.b16 %v254, %v253
  %v278 = vpack.c.b16 %v256, %v255
  %v279 = vpack.c.b16 %v258, %v257
  %v280 = vpack.c.b16 %v260, %v259
  %v281 = vpack.c.b16 %v262, %v261
  %v282 = vpack.c.b16 %v264, %v263
  %v283 = vpack.c.b16 %v266, %v265
  %v284 = vpack.c.b16 %v268, %v267
  %301 = vmatprep.subr.bf16.mxu0 0
  %302 = vmatpush1.bf16.msra.mxu0 %v269
  %303 = vmatprep.subr.bf16.mxu0 0
  %304 = vmatpush1.bf16.msra.mxu0 %v270
  %305 = vmatprep.subr.bf16.mxu0 0
  %306 = vmatpush1.bf16.msra.mxu0 %v271
  %307 = vmatprep.subr.bf16.mxu0 0
  %308 = vmatpush1.bf16.msra.mxu0 %v272
  %309 = vmatprep.subr.bf16.mxu0 0
  %310 = vmatpush1.bf16.msra.mxu0 %v273
  %311 = vmatprep.subr.bf16.mxu0 0
  %312 = vmatpush1.bf16.msra.mxu0 %v274
  %313 = vmatprep.subr.bf16.mxu0 0
  %314 = vmatpush1.bf16.msra.mxu0 %v275
  %315 = vmatprep.subr.bf16.mxu0 0
  %316 = vmatpush1.bf16.msra.mxu0 %v276
  %317 = vmatprep.subr.bf16.mxu0 0
  %318 = vmatpush1.bf16.msra.mxu0 %v277
  %319 = vmatprep.subr.bf16.mxu0 0
  %320 = vmatpush1.bf16.msra.mxu0 %v278
  %321 = vmatprep.subr.bf16.mxu0 0
  %322 = vmatpush1.bf16.msra.mxu0 %v279
  %323 = vmatprep.subr.bf16.mxu0 0
  %324 = vmatpush1.bf16.msra.mxu0 %v280
  %325 = vmatprep.subr.bf16.mxu0 0
  %326 = vmatpush1.bf16.msra.mxu0 %v281
  %327 = vmatprep.subr.bf16.mxu0 0
  %328 = vmatpush1.bf16.msra.mxu0 %v282
  %329 = vmatprep.subr.bf16.mxu0 0
  %330 = vmatpush1.bf16.msra.mxu0 %v283
  %331 = vmatprep.subr.bf16.mxu0 0
  %332 = vmatpush1.bf16.msra.mxu0 %v284
  %333 = vmatprep.mubr.bf16.mxu0 %v141
  %334 = vmatmul.mubr.bf16.gmra.mrb[0].mxu0 %v140
  %v335 = vpop.f32.mrb[0].mxu0
  %v336 = vadd.f32 %v203, %v335
  %v337 = vpop.f32.mrb[0].mxu0
  %v338 = vpop.f32.mrb[0].mxu0
  %v339 = vadd.f32 %v203, %v338
  %v340 = vpop.f32.mrb[0].mxu0
  %341 = vmatprep.mubr.bf16.mxu0 %v143
  %342 = vmatmul.mubr.bf16.gmra.mrb[0].mxu0 %v142
  %v343 = vpop.f32.mrb[0].mxu0
  %v344 = vadd.f32 %v203, %v343
  %v345 = vpop.f32.mrb[0].mxu0
  %v346 = vpop.f32.mrb[0].mxu0
  %v347 = vadd.f32 %v203, %v346
  %v348 = vpop.f32.mrb[0].mxu0
  %349 = vmatprep.mubr.bf16.mxu0 %v145
  %350 = vmatmul.mubr.bf16.gmra.mrb[0].mxu0 %v144
  %v351 = vpop.f32.mrb[0].mxu0
  %v352 = vadd.f32 %v203, %v351
  %v353 = vpop.f32.mrb[0].mxu0
  %v354 = vpop.f32.mrb[0].mxu0
  %v355 = vadd.f32 %v203, %v354
  %v356 = vpop.f32.mrb[0].mxu0
  %357 = vmatprep.mubr.bf16.mxu0 %v147
  %358 = vmatmul.mubr.bf16.gmra.mrb[0].mxu0 %v146
  %v359 = vpop.f32.mrb[0].mxu0
  %v360 = vadd.f32 %v203, %v359
  %v361 = vpop.f32.mrb[0].mxu0
  %v362 = vpop.f32.mrb[0].mxu0
  %v363 = vadd.f32 %v203, %v362
  %v364 = vpop.f32.mrb[0].mxu0
  %365 = vmatprep.mubr.bf16.mxu0 %v149
  %366 = vmatmul.mubr.bf16.gmra.mrb[0].mxu0 %v148
  %v367 = vpop.f32.mrb[0].mxu0
  %v368 = vadd.f32 %v203, %v367
  %v369 = vpop.f32.mrb[0].mxu0
  %v370 = vpop.f32.mrb[0].mxu0
  %v371 = vadd.f32 %v203, %v370
  %v372 = vpop.f32.mrb[0].mxu0
  %373 = vmatprep.mubr.bf16.mxu0 %v151
  %374 = vmatmul.mubr.bf16.gmra.mrb[0].mxu0 %v150
  %v375 = vpop.f32.mrb[0].mxu0
  %v376 = vadd.f32 %v203, %v375
  %v377 = vpop.f32.mrb[0].mxu0
  %v378 = vpop.f32.mrb[0].mxu0
  %v379 = vadd.f32 %v203, %v378
  %v380 = vpop.f32.mrb[0].mxu0
  %381 = vmatprep.mubr.bf16.mxu0 %v153
  %382 = vmatmul.mubr.bf16.gmra.mrb[0].mxu0 %v152
  %v383 = vpop.f32.mrb[0].mxu0
  %v384 = vadd.f32 %v203, %v383
  %v385 = vpop.f32.mrb[0].mxu0
  %v386 = vpop.f32.mrb[0].mxu0
  %v387 = vadd.f32 %v203, %v386
  %v388 = vpop.f32.mrb[0].mxu0
  %389 = vmatprep.mubr.bf16.mxu0 %v155
  %390 = vmatmul.mubr.bf16.gmra.mrb[0].mxu0 %v154
  %v391 = vpop.f32.mrb[0].mxu0
  %v392 = vadd.f32 %v203, %v391
  %v393 = vpop.f32.mrb[0].mxu0
  %v394 = vpop.f32.mrb[0].mxu0
  %v395 = vadd.f32 %v203, %v394
  %v396 = vpop.f32.mrb[0].mxu0
  %397 = vmatprep.mubr.bf16.mxu0 %v157
  %398 = vmatmul.mubr.bf16.gmra.mrb[0].mxu0 %v156
  %v399 = vpop.f32.mrb[0].mxu0
  %v400 = vadd.f32 %v203, %v399
  %v401 = vpop.f32.mrb[0].mxu0
  %v402 = vpop.f32.mrb[0].mxu0
  %v403 = vadd.f32 %v203, %v402
  %v404 = vpop.f32.mrb[0].mxu0
  %405 = vmatprep.mubr.bf16.mxu0 %v159
  %406 = vmatmul.mubr.bf16.gmra.mrb[0].mxu0 %v158
  %v407 = vpop.f32.mrb[0].mxu0
  %v408 = vadd.f32 %v203, %v407
  %v409 = vpop.f32.mrb[0].mxu0
  %v410 = vpop.f32.mrb[0].mxu0
  %v411 = vadd.f32 %v203, %v410
  %v412 = vpop.f32.mrb[0].mxu0
  %413 = vmatprep.mubr.bf16.mxu0 %v161
  %414 = vmatmul.mubr.bf16.gmra.mrb[0].mxu0 %v160
  %v415 = vpop.f32.mrb[0].mxu0
  %v416 = vadd.f32 %v203, %v415
  %v417 = vpop.f32.mrb[0].mxu0
  %v418 = vpop.f32.mrb[0].mxu0
  %v419 = vadd.f32 %v203, %v418
  %v420 = vpop.f32.mrb[0].mxu0
  %421 = vmatprep.mubr.bf16.mxu0 %v163
  %422 = vmatmul.mubr.bf16.gmra.mrb[0].mxu0 %v162
  %v423 = vpop.f32.mrb[0].mxu0
  %v424 = vadd.f32 %v203, %v423
  %v425 = vpop.f32.mrb[0].mxu0
  %v426 = vpop.f32.mrb[0].mxu0
  %v427 = vadd.f32 %v203, %v426
  %v428 = vpop.f32.mrb[0].mxu0
  %429 = vmatprep.mubr.bf16.mxu0 %v165
  %430 = vmatmul.mubr.bf16.gmra.mrb[0].mxu0 %v164
  %v431 = vpop.f32.mrb[0].mxu0
  %v432 = vadd.f32 %v203, %v431
  %v433 = vpop.f32.mrb[0].mxu0
  %v434 = vpop.f32.mrb[0].mxu0
  %v435 = vpop.f32.mrb[0].mxu0
  %436 = vdwg.mxu0
  %v437 = vsel %vm65, 1, 0
  %v438 = vsel %vm66, 1, 0
  %v439 = vsel %vm67, 1, 0
  %v440 = vsel %vm68, 1, 0
  %v441 = vsel %vm69, 1, 0
  %v442 = vsel %vm70, 1, 0
  %v443 = vsel %vm71, 1, 0
  %v444 = vsel %vm72, 1, 0
  %v445 = vsel %vm73, 1, 0
  %v446 = vsel %vm74, 1, 0
  %v447 = vsel %vm75, 1, 0
  %v448 = vsel %vm76, 1, 0
  %v449 = vsel %vm77, 1, 0
  %v450 = vsel %vm78, 1, 0
  %v451 = vsel %vm79, 1, 0
  %v452 = vsel %vm80, 1, 0
  %v453 = vsel %vm81, 1, 0
  %v454 = vsel %vm82, 1, 0
  %v455 = vsel %vm83, 1, 0
  %v456 = vsel %vm84, 1, 0
  %v457 = vsel %vm85, 1, 0
  %v458 = vsel %vm86, 1, 0
  %v459 = vsel %vm87, 1, 0
  %v460 = vsel %vm88, 1, 0
  %v461 = vsel %vm89, 1, 0
  %vm462 = vcmp.eq.s32.totalorder %v437, 1
  %vm463 = vcmp.eq.s32.totalorder %v438, 1
  %vm464 = vcmp.eq.s32.totalorder %v439, 1
  %vm465 = vcmp.eq.s32.totalorder %v440, 1
  %vm466 = vcmp.eq.s32.totalorder %v441, 1
  %vm467 = vcmp.eq.s32.totalorder %v442, 1
  %vm468 = vcmp.eq.s32.totalorder %v443, 1
  %vm469 = vcmp.eq.s32.totalorder %v444, 1
  %vm470 = vcmp.eq.s32.totalorder %v445, 1
  %vm471 = vcmp.eq.s32.totalorder %v446, 1
  %vm472 = vcmp.eq.s32.totalorder %v447, 1
  %vm473 = vcmp.eq.s32.totalorder %v448, 1
  %vm474 = vcmp.eq.s32.totalorder %v449, 1
  %vm475 = vcmp.eq.s32.totalorder %v450, 1
  %vm476 = vcmp.eq.s32.totalorder %v451, 1
  %vm477 = vcmp.eq.s32.totalorder %v452, 1
  %vm478 = vcmp.eq.s32.totalorder %v453, 1
  %vm479 = vcmp.eq.s32.totalorder %v454, 1
  %vm480 = vcmp.eq.s32.totalorder %v455, 1
  %vm481 = vcmp.eq.s32.totalorder %v456, 1
  %vm482 = vcmp.eq.s32.totalorder %v457, 1
  %vm483 = vcmp.eq.s32.totalorder %v458, 1
  %vm484 = vcmp.eq.s32.totalorder %v459, 1
  %vm485 = vcmp.eq.s32.totalorder %v460, 1
  %vm486 = vcmp.eq.s32.totalorder %v461, 1
  %v487 = vsel %vm462, %v336, 0.0
  %v488 = vsel %vm463, %v339, 0.0
  %v489 = vsel %vm464, %v344, 0.0
  %v490 = vsel %vm465, %v347, 0.0
  %v491 = vsel %vm466, %v352, 0.0
  %v492 = vsel %vm467, %v355, 0.0
  %v493 = vsel %vm468, %v360, 0.0
  %v494 = vsel %vm469, %v363, 0.0
  %v495 = vsel %vm470, %v368, 0.0
  %v496 = vsel %vm471, %v371, 0.0
  %v497 = vsel %vm472, %v376, 0.0
  %v498 = vsel %vm473, %v379, 0.0
  %v499 = vsel %vm474, %v384, 0.0
  %v500 = vsel %vm475, %v387, 0.0
  %v501 = vsel %vm476, %v392, 0.0
  %v502 = vsel %vm477, %v395, 0.0
  %v503 = vsel %vm478, %v400, 0.0
  %v504 = vsel %vm479, %v403, 0.0
  %v505 = vsel %vm480, %v408, 0.0
  %v506 = vsel %vm481, %v411, 0.0
  %v507 = vsel %vm482, %v416, 0.0
  %v508 = vsel %vm483, %v419, 0.0
  %v509 = vsel %vm484, %v424, 0.0
  %v510 = vsel %vm485, %v427, 0.0
  %v511 = vsel %vm486, %v432, 0.0
  %v512 = vadd.f32 %v487, %v488
  %v513 = vadd.f32 %v512, %v489
  %v514 = vadd.f32 %v513, %v490
  %v515 = vadd.f32 %v514, %v491
  %v516 = vadd.f32 %v515, %v492
  %v517 = vadd.f32 %v516, %v493
  %v518 = vadd.f32 %v517, %v494
  %v519 = vadd.f32 %v518, %v495
  %v520 = vadd.f32 %v519, %v496
  %v521 = vadd.f32 %v520, %v497
  %v522 = vadd.f32 %v521, %v498
  %v523 = vadd.f32 %v522, %v499
  %v524 = vadd.f32 %v523, %v500
  %v525 = vadd.f32 %v524, %v501
  %v526 = vadd.f32 %v525, %v502
  %v527 = vadd.f32 %v526, %v503
  %v528 = vadd.f32 %v527, %v504
  %v529 = vadd.f32 %v528, %v505
  %v530 = vadd.f32 %v529, %v506
  %v531 = vadd.f32 %v530, %v507
  %v532 = vadd.f32 %v531, %v508
  %v533 = vadd.f32 %v532, %v509
  %v534 = vadd.f32 %v533, %v510
  %v535 = vadd.f32 %v534, %v511
  %v536 = vrot.slane %v535, 4
  %v537 = vadd.f32 %v535, %v536
  %v538 = vrot.slane %v537, 2
  %v539 = vadd.f32 %v537, %v538
  %v540 = vrot.slane %v539, 1
  %v541 = vadd.f32 %v539, %v540
  %v542 = vmul.f32 %v541, 0.005
  %v543 = vmul.f32 %v487, %v487
  %v544 = vmul.f32 %v488, %v488
  %v545 = vmul.f32 %v489, %v489
  %v546 = vmul.f32 %v490, %v490
  %v547 = vmul.f32 %v491, %v491
  %v548 = vmul.f32 %v492, %v492
  %v549 = vmul.f32 %v493, %v493
  %v550 = vmul.f32 %v494, %v494
  %v551 = vmul.f32 %v495, %v495
  %v552 = vmul.f32 %v496, %v496
  %v553 = vmul.f32 %v497, %v497
  %v554 = vmul.f32 %v498, %v498
  %v555 = vmul.f32 %v499, %v499
  %v556 = vmul.f32 %v500, %v500
  %v557 = vmul.f32 %v501, %v501
  %v558 = vmul.f32 %v502, %v502
  %v559 = vmul.f32 %v503, %v503
  %v560 = vmul.f32 %v504, %v504
  %v561 = vmul.f32 %v505, %v505
  %v562 = vmul.f32 %v506, %v506
  %v563 = vmul.f32 %v507, %v507
  %v564 = vmul.f32 %v508, %v508
  %v565 = vmul.f32 %v509, %v509
  %v566 = vmul.f32 %v510, %v510
  %v567 = vmul.f32 %v511, %v511
  %v568 = vadd.f32 %v543, %v544
  %v569 = vadd.f32 %v568, %v545
  %v570 = vadd.f32 %v569, %v546
  %v571 = vadd.f32 %v570, %v547
  %v572 = vadd.f32 %v571, %v548
  %v573 = vadd.f32 %v572, %v549
  %v574 = vadd.f32 %v573, %v550
  %v575 = vadd.f32 %v574, %v551
  %v576 = vadd.f32 %v575, %v552
  %v577 = vadd.f32 %v576, %v553
  %v578 = vadd.f32 %v577, %v554
  %v579 = vadd.f32 %v578, %v555
  %v580 = vadd.f32 %v579, %v556
  %v581 = vadd.f32 %v580, %v557
  %v582 = vadd.f32 %v581, %v558
  %v583 = vadd.f32 %v582, %v559
  %v584 = vadd.f32 %v583, %v560
  %v585 = vadd.f32 %v584, %v561
  %v586 = vadd.f32 %v585, %v562
  %v587 = vadd.f32 %v586, %v563
  %v588 = vadd.f32 %v587, %v564
  %v589 = vadd.f32 %v588, %v565
  %v590 = vadd.f32 %v589, %v566
  %v591 = vadd.f32 %v590, %v567
  %v592 = vrot.slane %v591, 4
  %v593 = vadd.f32 %v591, %v592
  %v594 = vrot.slane %v593, 2
  %v595 = vadd.f32 %v593, %v594
  %v596 = vrot.slane %v595, 1
  %v597 = vadd.f32 %v595, %v596
  %v598 = vmul.f32 %v597, 0.005
  %v599 = vmul.f32 %v542, %v542
  %v600 = vsub.f32 %v598, %v599
  %v601 = vmax.f32 %v600, 0.0
  %v602 = vld [vmem:[%s7] sm:$0x1]
  %v603 = vadd.f32 %v601, 1e-05
  %v604 = vrsqrt.pop %v603
  %v605 = vmul.f32 %v602, %v604
  %v606 = vsub.f32 %v336, %v542
  %v607 = vsub.f32 %v339, %v542
  %v608 = vsub.f32 %v344, %v542
  %v609 = vsub.f32 %v347, %v542
  %v610 = vsub.f32 %v352, %v542
  %v611 = vsub.f32 %v355, %v542
  %v612 = vsub.f32 %v360, %v542
  %v613 = vsub.f32 %v363, %v542
  %v614 = vsub.f32 %v368, %v542
  %v615 = vsub.f32 %v371, %v542
  %v616 = vsub.f32 %v376, %v542
  %v617 = vsub.f32 %v379, %v542
  %v618 = vsub.f32 %v384, %v542
  %v619 = vsub.f32 %v387, %v542
  %v620 = vsub.f32 %v392, %v542
  %v621 = vsub.f32 %v395, %v542
  %v622 = vsub.f32 %v400, %v542
  %v623 = vsub.f32 %v403, %v542
  %v624 = vsub.f32 %v408, %v542
  %v625 = vsub.f32 %v411, %v542
  %v626 = vsub.f32 %v416, %v542
  %v627 = vsub.f32 %v419, %v542
  %v628 = vsub.f32 %v424, %v542
  %v629 = vsub.f32 %v427, %v542
  %v630 = vsub.f32 %v432, %v542
  %v632 = vlaneseq
  %v633 = vshrl.u32 %v632, 7
  %v634 = vsub.s32 0, %v633
  %v635 = vrot.slane %v605, %v634
  %v637 = vmul.f32 %v606, %v635
  %v638 = vmul.f32 %v607, %v635
  %v639 = vmul.f32 %v608, %v635
  %v640 = vmul.f32 %v609, %v635
  %v641 = vmul.f32 %v610, %v635
  %v642 = vmul.f32 %v611, %v635
  %v643 = vmul.f32 %v612, %v635
  %v644 = vmul.f32 %v613, %v635
  %v645 = vmul.f32 %v614, %v635
  %v646 = vmul.f32 %v615, %v635
  %v647 = vmul.f32 %v616, %v635
  %v648 = vmul.f32 %v617, %v635
  %v649 = vmul.f32 %v618, %v635
  %v650 = vmul.f32 %v619, %v635
  %v651 = vmul.f32 %v620, %v635
  %v652 = vmul.f32 %v621, %v635
  %v653 = vmul.f32 %v622, %v635
  %v654 = vmul.f32 %v623, %v635
  %v655 = vmul.f32 %v624, %v635
  %v656 = vmul.f32 %v625, %v635
  %v657 = vmul.f32 %v626, %v635
  %v658 = vmul.f32 %v627, %v635
  %v659 = vmul.f32 %v628, %v635
  %v660 = vmul.f32 %v629, %v635
  %v661 = vmul.f32 %v630, %v635
  %v662 = vld [vmem:[%s9] sm:$0x1]
  %v664 = vlaneseq
  %v665 = vshrl.u32 %v664, 7
  %v666 = vsub.s32 0, %v665
  %v667 = vrot.slane %v662, %v666
  %v669 = vadd.f32 %v637, %v667
  %v670 = vadd.f32 %v638, %v667
  %v671 = vadd.f32 %v639, %v667
  %v672 = vadd.f32 %v640, %v667
  %v673 = vadd.f32 %v641, %v667
  %v674 = vadd.f32 %v642, %v667
  %v675 = vadd.f32 %v643, %v667
  %v676 = vadd.f32 %v644, %v667
  %v677 = vadd.f32 %v645, %v667
  %v678 = vadd.f32 %v646, %v667
  %v679 = vadd.f32 %v647, %v667
  %v680 = vadd.f32 %v648, %v667
  %v681 = vadd.f32 %v649, %v667
  %v682 = vadd.f32 %v650, %v667
  %v683 = vadd.f32 %v651, %v667
  %v684 = vadd.f32 %v652, %v667
  %v685 = vadd.f32 %v653, %v667
  %v686 = vadd.f32 %v654, %v667
  %v687 = vadd.f32 %v655, %v667
  %v688 = vadd.f32 %v656, %v667
  %v689 = vadd.f32 %v657, %v667
  %v690 = vadd.f32 %v658, %v667
  %v691 = vadd.f32 %v659, %v667
  %v692 = vadd.f32 %v660, %v667
  %v693 = vadd.f32 %v661, %v667
  %v694 = vmax.f32 %v669, 0.0
  %v695 = vmax.f32 %v670, 0.0
  %v696 = vmax.f32 %v671, 0.0
  %v697 = vmax.f32 %v672, 0.0
  %v698 = vmax.f32 %v673, 0.0
  %v699 = vmax.f32 %v674, 0.0
  %v700 = vmax.f32 %v675, 0.0
  %v701 = vmax.f32 %v676, 0.0
  %v702 = vmax.f32 %v677, 0.0
  %v703 = vmax.f32 %v678, 0.0
  %v704 = vmax.f32 %v679, 0.0
  %v705 = vmax.f32 %v680, 0.0
  %v706 = vmax.f32 %v681, 0.0
  %v707 = vmax.f32 %v682, 0.0
  %v708 = vmax.f32 %v683, 0.0
  %v709 = vmax.f32 %v684, 0.0
  %v710 = vmax.f32 %v685, 0.0
  %v711 = vmax.f32 %v686, 0.0
  %v712 = vmax.f32 %v687, 0.0
  %v713 = vmax.f32 %v688, 0.0
  %v714 = vmax.f32 %v689, 0.0
  %v715 = vmax.f32 %v690, 0.0
  %v716 = vmax.f32 %v691, 0.0
  %v717 = vmax.f32 %v692, 0.0
  %v718 = vmax.f32 %v693, 0.0
  %v719 = vpack.c.bf16 %v695, %v694
  %v720 = vpack.c.bf16 %v697, %v696
  %v721 = vpack.c.bf16 %v699, %v698
  %v722 = vpack.c.bf16 %v701, %v700
  %v723 = vpack.c.bf16 %v703, %v702
  %v724 = vpack.c.bf16 %v705, %v704
  %v725 = vpack.c.bf16 %v707, %v706
  %v726 = vpack.c.bf16 %v709, %v708
  %v727 = vpack.c.bf16 %v711, %v710
  %v728 = vpack.c.bf16 %v713, %v712
  %v729 = vpack.c.bf16 %v715, %v714
  %v730 = vpack.c.bf16 %v717, %v716
  %v731 = vpack.c.bf16 %v718, %v718
  %v732 = vld [vmem:[%s2] sm:$0xf]
  %v733 = vld [vmem:[%s2 + $0x4] sm:$0xf]
  %v734 = vld [vmem:[%s2 + $0x8] sm:$0xf]
  %v735 = vld [vmem:[%s2 + $0xc] sm:$0xf]
  %v736 = vld [vmem:[%s2 + $0x10] sm:$0xf]
  %v737 = vld [vmem:[%s2 + $0x14] sm:$0xf]
  %v738 = vld [vmem:[%s2 + $0x18] sm:$0xf]
  %v739 = vld [vmem:[%s2 + $0x1c] sm:$0xf]
  %v740 = vld [vmem:[%s2 + $0x20] sm:$0xf]
  %v741 = vld [vmem:[%s2 + $0x24] sm:$0xf]
  %v742 = vld [vmem:[%s2 + $0x28] sm:$0xf]
  %v743 = vld [vmem:[%s2 + $0x2c] sm:$0xf]
  %v744 = vld [vmem:[%s2 + $0x30] sm:$0xf]
  %v745 = vld [vmem:[%s2 + $0x34] sm:$0xf]
  %v746 = vld [vmem:[%s2 + $0x38] sm:$0xf]
  %v747 = vld [vmem:[%s2 + $0x3c] sm:$0xf]
  %v748 = vld [vmem:[%s5] sm:$0x1]
  %v750 = vlaneseq
  %v751 = vshrl.u32 %v750, 7
  %v752 = vsub.s32 0, %v751
  %v753 = vrot.slane %v748, %v752
  %v771 = vunpack.c.l.b16 %v732
  %v772 = vunpack.c.l.b16 %v733
  %v773 = vunpack.c.l.b16 %v734
  %v774 = vunpack.c.l.b16 %v735
  %v775 = vunpack.c.l.b16 %v736
  %v776 = vunpack.c.l.b16 %v737
  %v777 = vunpack.c.l.b16 %v738
  %v778 = vunpack.c.l.b16 %v739
  %v779 = vunpack.c.l.b16 %v740
  %v780 = vunpack.c.l.b16 %v741
  %v781 = vunpack.c.l.b16 %v742
  %v782 = vunpack.c.l.b16 %v743
  %v783 = vunpack.c.l.b16 %v744
  %v784 = vunpack.c.l.b16 %v745
  %v785 = vunpack.c.l.b16 %v746
  %v786 = vunpack.c.l.b16 %v747
  %v787 = vpack.c.b16 %v772, %v771
  %v788 = vpack.c.b16 %v774, %v773
  %v789 = vpack.c.b16 %v776, %v775
  %v790 = vpack.c.b16 %v778, %v777
  %v791 = vpack.c.b16 %v780, %v779
  %v792 = vpack.c.b16 %v782, %v781
  %v793 = vpack.c.b16 %v784, %v783
  %v794 = vpack.c.b16 %v786, %v785
  %803 = vmatprep.subr.bf16.mxu0 0
  %804 = vmatpush1.bf16.msra.mxu0 %v787
  %805 = vmatprep.subr.bf16.mxu0 0
  %806 = vmatpush1.bf16.msra.mxu0 %v788
  %807 = vmatprep.subr.bf16.mxu0 0
  %808 = vmatpush1.bf16.msra.mxu0 %v789
  %809 = vmatprep.subr.bf16.mxu0 0
  %810 = vmatpush1.bf16.msra.mxu0 %v790
  %811 = vmatprep.subr.bf16.mxu0 0
  %812 = vmatpush1.bf16.msra.mxu0 %v791
  %813 = vmatprep.subr.bf16.mxu0 0
  %814 = vmatpush1.bf16.msra.mxu0 %v792
  %815 = vmatprep.subr.bf16.mxu0 0
  %816 = vmatpush1.bf16.msra.mxu0 %v793
  %817 = vmatprep.subr.bf16.mxu0 0
  %818 = vmatpush1.bf16.msra.mxu0 %v794
  %819 = vmatprep.subr.bf16.mxu0 0
  %820 = vmatpush1.bf16.msra.mxu0 0
  %821 = vmatprep.subr.bf16.mxu0 0
  %822 = vmatpush1.bf16.msra.mxu0 0
  %823 = vmatprep.subr.bf16.mxu0 0
  %824 = vmatpush1.bf16.msra.mxu0 0
  %825 = vmatprep.subr.bf16.mxu0 0
  %826 = vmatpush1.bf16.msra.mxu0 0
  %827 = vmatprep.subr.bf16.mxu0 0
  %828 = vmatpush1.bf16.msra.mxu0 0
  %829 = vmatprep.subr.bf16.mxu0 0
  %830 = vmatpush1.bf16.msra.mxu0 0
  %831 = vmatprep.subr.bf16.mxu0 0
  %832 = vmatpush1.bf16.msra.mxu0 0
  %833 = vmatprep.subr.bf16.mxu0 0
  %834 = vmatpush1.bf16.msra.mxu0 0
  %835 = vmatprep.mubr.bf16.mxu0 0
  %836 = vmatmul.mubr.bf16.gmra.mrb[0].mxu0 %v719
  %v837 = vpop.f32.mrb[0].mxu0
  %v838 = vadd.f32 %v753, %v837
  %v839 = vpop.f32.mrb[0].mxu0
  %v840 = vpop.f32.mrb[0].mxu0
  %v841 = vadd.f32 %v753, %v840
  %v842 = vpop.f32.mrb[0].mxu0
  %843 = vmatprep.mubr.bf16.mxu0 0
  %844 = vmatmul.mubr.bf16.gmra.mrb[0].mxu0 %v720
  %v845 = vpop.f32.mrb[0].mxu0
  %v846 = vadd.f32 %v753, %v845
  %v847 = vpop.f32.mrb[0].mxu0
  %v848 = vpop.f32.mrb[0].mxu0
  %v849 = vadd.f32 %v753, %v848
  %v850 = vpop.f32.mrb[0].mxu0
  %851 = vmatprep.mubr.bf16.mxu0 0
  %852 = vmatmul.mubr.bf16.gmra.mrb[0].mxu0 %v721
  %v853 = vpop.f32.mrb[0].mxu0
  %v854 = vadd.f32 %v753, %v853
  %v855 = vpop.f32.mrb[0].mxu0
  %v856 = vpop.f32.mrb[0].mxu0
  %v857 = vadd.f32 %v753, %v856
  %v858 = vpop.f32.mrb[0].mxu0
  %859 = vmatprep.mubr.bf16.mxu0 0
  %860 = vmatmul.mubr.bf16.gmra.mrb[0].mxu0 %v722
  %v861 = vpop.f32.mrb[0].mxu0
  %v862 = vadd.f32 %v753, %v861
  %v863 = vpop.f32.mrb[0].mxu0
  %v864 = vpop.f32.mrb[0].mxu0
  %v865 = vadd.f32 %v753, %v864
  %v866 = vpop.f32.mrb[0].mxu0
  %867 = vmatprep.mubr.bf16.mxu0 0
  %868 = vmatmul.mubr.bf16.gmra.mrb[0].mxu0 %v723
  %v869 = vpop.f32.mrb[0].mxu0
  %v870 = vadd.f32 %v753, %v869
  %v871 = vpop.f32.mrb[0].mxu0
  %v872 = vpop.f32.mrb[0].mxu0
  %v873 = vadd.f32 %v753, %v872
  %v874 = vpop.f32.mrb[0].mxu0
  %875 = vmatprep.mubr.bf16.mxu0 0
  %876 = vmatmul.mubr.bf16.gmra.mrb[0].mxu0 %v724
  %v877 = vpop.f32.mrb[0].mxu0
  %v878 = vadd.f32 %v753, %v877
  %v879 = vpop.f32.mrb[0].mxu0
  %v880 = vpop.f32.mrb[0].mxu0
  %v881 = vadd.f32 %v753, %v880
  %v882 = vpop.f32.mrb[0].mxu0
  %883 = vmatprep.mubr.bf16.mxu0 0
  %884 = vmatmul.mubr.bf16.gmra.mrb[0].mxu0 %v725
  %v885 = vpop.f32.mrb[0].mxu0
  %v886 = vadd.f32 %v753, %v885
  %v887 = vpop.f32.mrb[0].mxu0
  %v888 = vpop.f32.mrb[0].mxu0
  %v889 = vadd.f32 %v753, %v888
  %v890 = vpop.f32.mrb[0].mxu0
  %891 = vmatprep.mubr.bf16.mxu0 0
  %892 = vmatmul.mubr.bf16.gmra.mrb[0].mxu0 %v726
  %v893 = vpop.f32.mrb[0].mxu0
  %v894 = vadd.f32 %v753, %v893
  %v895 = vpop.f32.mrb[0].mxu0
  %v896 = vpop.f32.mrb[0].mxu0
  %v897 = vadd.f32 %v753, %v896
  %v898 = vpop.f32.mrb[0].mxu0
  %899 = vmatprep.mubr.bf16.mxu0 0
  %900 = vmatmul.mubr.bf16.gmra.mrb[0].mxu0 %v727
  %v901 = vpop.f32.mrb[0].mxu0
  %v902 = vadd.f32 %v753, %v901
  %v903 = vpop.f32.mrb[0].mxu0
  %v904 = vpop.f32.mrb[0].mxu0
  %v905 = vadd.f32 %v753, %v904
  %v906 = vpop.f32.mrb[0].mxu0
  %907 = vmatprep.mubr.bf16.mxu0 0
  %908 = vmatmul.mubr.bf16.gmra.mrb[0].mxu0 %v728
  %v909 = vpop.f32.mrb[0].mxu0
  %v910 = vadd.f32 %v753, %v909
  %v911 = vpop.f32.mrb[0].mxu0
  %v912 = vpop.f32.mrb[0].mxu0
  %v913 = vadd.f32 %v753, %v912
  %v914 = vpop.f32.mrb[0].mxu0
  %915 = vmatprep.mubr.bf16.mxu0 0
  %916 = vmatmul.mubr.bf16.gmra.mrb[0].mxu0 %v729
  %v917 = vpop.f32.mrb[0].mxu0
  %v918 = vadd.f32 %v753, %v917
  %v919 = vpop.f32.mrb[0].mxu0
  %v920 = vpop.f32.mrb[0].mxu0
  %v921 = vadd.f32 %v753, %v920
  %v922 = vpop.f32.mrb[0].mxu0
  %923 = vmatprep.mubr.bf16.mxu0 0
  %924 = vmatmul.mubr.bf16.gmra.mrb[0].mxu0 %v730
  %v925 = vpop.f32.mrb[0].mxu0
  %v926 = vadd.f32 %v753, %v925
  %v927 = vpop.f32.mrb[0].mxu0
  %v928 = vpop.f32.mrb[0].mxu0
  %v929 = vadd.f32 %v753, %v928
  %v930 = vpop.f32.mrb[0].mxu0
  %931 = vmatprep.mubr.bf16.mxu0 0
  %932 = vmatmul.mubr.bf16.gmra.mrb[0].mxu0 %v731
  %v933 = vpop.f32.mrb[0].mxu0
  %v934 = vadd.f32 %v753, %v933
  %v935 = vpop.f32.mrb[0].mxu0
  %v936 = vpop.f32.mrb[0].mxu0
  %v937 = vpop.f32.mrb[0].mxu0
  %938 = vdwg.mxu0
  %v939 = vsel %vm462, %v838, 0.0
  %v940 = vsel %vm463, %v841, 0.0
  %v941 = vsel %vm464, %v846, 0.0
  %v942 = vsel %vm465, %v849, 0.0
  %v943 = vsel %vm466, %v854, 0.0
  %v944 = vsel %vm467, %v857, 0.0
  %v945 = vsel %vm468, %v862, 0.0
  %v946 = vsel %vm469, %v865, 0.0
  %v947 = vsel %vm470, %v870, 0.0
  %v948 = vsel %vm471, %v873, 0.0
  %v949 = vsel %vm472, %v878, 0.0
  %v950 = vsel %vm473, %v881, 0.0
  %v951 = vsel %vm474, %v886, 0.0
  %v952 = vsel %vm475, %v889, 0.0
  %v953 = vsel %vm476, %v894, 0.0
  %v954 = vsel %vm477, %v897, 0.0
  %v955 = vsel %vm478, %v902, 0.0
  %v956 = vsel %vm479, %v905, 0.0
  %v957 = vsel %vm480, %v910, 0.0
  %v958 = vsel %vm481, %v913, 0.0
  %v959 = vsel %vm482, %v918, 0.0
  %v960 = vsel %vm483, %v921, 0.0
  %v961 = vsel %vm484, %v926, 0.0
  %v962 = vsel %vm485, %v929, 0.0
  %v963 = vsel %vm486, %v934, 0.0
  %v964 = vadd.f32 %v939, %v940
  %v965 = vadd.f32 %v964, %v941
  %v966 = vadd.f32 %v965, %v942
  %v967 = vadd.f32 %v966, %v943
  %v968 = vadd.f32 %v967, %v944
  %v969 = vadd.f32 %v968, %v945
  %v970 = vadd.f32 %v969, %v946
  %v971 = vadd.f32 %v970, %v947
  %v972 = vadd.f32 %v971, %v948
  %v973 = vadd.f32 %v972, %v949
  %v974 = vadd.f32 %v973, %v950
  %v975 = vadd.f32 %v974, %v951
  %v976 = vadd.f32 %v975, %v952
  %v977 = vadd.f32 %v976, %v953
  %v978 = vadd.f32 %v977, %v954
  %v979 = vadd.f32 %v978, %v955
  %v980 = vadd.f32 %v979, %v956
  %v981 = vadd.f32 %v980, %v957
  %v982 = vadd.f32 %v981, %v958
  %v983 = vadd.f32 %v982, %v959
  %v984 = vadd.f32 %v983, %v960
  %v985 = vadd.f32 %v984, %v961
  %v986 = vadd.f32 %v985, %v962
  %v987 = vadd.f32 %v986, %v963
  %v988 = vrot.slane %v987, 4
  %v989 = vadd.f32 %v987, %v988
  %v990 = vrot.slane %v989, 2
  %v991 = vadd.f32 %v989, %v990
  %v992 = vrot.slane %v991, 1
  %v993 = vadd.f32 %v991, %v992
  %v994 = vmul.f32 %v993, 0.005
  %v995 = vmul.f32 %v939, %v939
  %v996 = vmul.f32 %v940, %v940
  %v997 = vmul.f32 %v941, %v941
  %v998 = vmul.f32 %v942, %v942
  %v999 = vmul.f32 %v943, %v943
  %v1000 = vmul.f32 %v944, %v944
  %v1001 = vmul.f32 %v945, %v945
  %v1002 = vmul.f32 %v946, %v946
  %v1003 = vmul.f32 %v947, %v947
  %v1004 = vmul.f32 %v948, %v948
  %v1005 = vmul.f32 %v949, %v949
  %v1006 = vmul.f32 %v950, %v950
  %v1007 = vmul.f32 %v951, %v951
  %v1008 = vmul.f32 %v952, %v952
  %v1009 = vmul.f32 %v953, %v953
  %v1010 = vmul.f32 %v954, %v954
  %v1011 = vmul.f32 %v955, %v955
  %v1012 = vmul.f32 %v956, %v956
  %v1013 = vmul.f32 %v957, %v957
  %v1014 = vmul.f32 %v958, %v958
  %v1015 = vmul.f32 %v959, %v959
  %v1016 = vmul.f32 %v960, %v960
  %v1017 = vmul.f32 %v961, %v961
  %v1018 = vmul.f32 %v962, %v962
  %v1019 = vmul.f32 %v963, %v963
  %v1020 = vadd.f32 %v995, %v996
  %v1021 = vadd.f32 %v1020, %v997
  %v1022 = vadd.f32 %v1021, %v998
  %v1023 = vadd.f32 %v1022, %v999
  %v1024 = vadd.f32 %v1023, %v1000
  %v1025 = vadd.f32 %v1024, %v1001
  %v1026 = vadd.f32 %v1025, %v1002
  %v1027 = vadd.f32 %v1026, %v1003
  %v1028 = vadd.f32 %v1027, %v1004
  %v1029 = vadd.f32 %v1028, %v1005
  %v1030 = vadd.f32 %v1029, %v1006
  %v1031 = vadd.f32 %v1030, %v1007
  %v1032 = vadd.f32 %v1031, %v1008
  %v1033 = vadd.f32 %v1032, %v1009
  %v1034 = vadd.f32 %v1033, %v1010
  %v1035 = vadd.f32 %v1034, %v1011
  %v1036 = vadd.f32 %v1035, %v1012
  %v1037 = vadd.f32 %v1036, %v1013
  %v1038 = vadd.f32 %v1037, %v1014
  %v1039 = vadd.f32 %v1038, %v1015
  %v1040 = vadd.f32 %v1039, %v1016
  %v1041 = vadd.f32 %v1040, %v1017
  %v1042 = vadd.f32 %v1041, %v1018
  %v1043 = vadd.f32 %v1042, %v1019
  %v1044 = vrot.slane %v1043, 4
  %v1045 = vadd.f32 %v1043, %v1044
  %v1046 = vrot.slane %v1045, 2
  %v1047 = vadd.f32 %v1045, %v1046
  %v1048 = vrot.slane %v1047, 1
  %v1049 = vadd.f32 %v1047, %v1048
  %v1050 = vmul.f32 %v1049, 0.005
  %v1051 = vmul.f32 %v994, %v994
  %v1052 = vsub.f32 %v1050, %v1051
  %v1053 = vmax.f32 %v1052, 0.0
  %v1054 = vld [vmem:[%s8] sm:$0x1]
  %v1055 = vadd.f32 %v1053, 1e-05
  %v1056 = vrsqrt.pop %v1055
  %v1057 = vmul.f32 %v1054, %v1056
  %v1058 = vsub.f32 %v838, %v994
  %v1059 = vsub.f32 %v841, %v994
  %v1060 = vsub.f32 %v846, %v994
  %v1061 = vsub.f32 %v849, %v994
  %v1062 = vsub.f32 %v854, %v994
  %v1063 = vsub.f32 %v857, %v994
  %v1064 = vsub.f32 %v862, %v994
  %v1065 = vsub.f32 %v865, %v994
  %v1066 = vsub.f32 %v870, %v994
  %v1067 = vsub.f32 %v873, %v994
  %v1068 = vsub.f32 %v878, %v994
  %v1069 = vsub.f32 %v881, %v994
  %v1070 = vsub.f32 %v886, %v994
  %v1071 = vsub.f32 %v889, %v994
  %v1072 = vsub.f32 %v894, %v994
  %v1073 = vsub.f32 %v897, %v994
  %v1074 = vsub.f32 %v902, %v994
  %v1075 = vsub.f32 %v905, %v994
  %v1076 = vsub.f32 %v910, %v994
  %v1077 = vsub.f32 %v913, %v994
  %v1078 = vsub.f32 %v918, %v994
  %v1079 = vsub.f32 %v921, %v994
  %v1080 = vsub.f32 %v926, %v994
  %v1081 = vsub.f32 %v929, %v994
  %v1082 = vsub.f32 %v934, %v994
  %v1084 = vlaneseq
  %v1085 = vshrl.u32 %v1084, 7
  %v1086 = vsub.s32 0, %v1085
  %v1087 = vrot.slane %v1057, %v1086
  %v1089 = vmul.f32 %v1058, %v1087
  %v1090 = vmul.f32 %v1059, %v1087
  %v1091 = vmul.f32 %v1060, %v1087
  %v1092 = vmul.f32 %v1061, %v1087
  %v1093 = vmul.f32 %v1062, %v1087
  %v1094 = vmul.f32 %v1063, %v1087
  %v1095 = vmul.f32 %v1064, %v1087
  %v1096 = vmul.f32 %v1065, %v1087
  %v1097 = vmul.f32 %v1066, %v1087
  %v1098 = vmul.f32 %v1067, %v1087
  %v1099 = vmul.f32 %v1068, %v1087
  %v1100 = vmul.f32 %v1069, %v1087
  %v1101 = vmul.f32 %v1070, %v1087
  %v1102 = vmul.f32 %v1071, %v1087
  %v1103 = vmul.f32 %v1072, %v1087
  %v1104 = vmul.f32 %v1073, %v1087
  %v1105 = vmul.f32 %v1074, %v1087
  %v1106 = vmul.f32 %v1075, %v1087
  %v1107 = vmul.f32 %v1076, %v1087
  %v1108 = vmul.f32 %v1077, %v1087
  %v1109 = vmul.f32 %v1078, %v1087
  %v1110 = vmul.f32 %v1079, %v1087
  %v1111 = vmul.f32 %v1080, %v1087
  %v1112 = vmul.f32 %v1081, %v1087
  %v1113 = vmul.f32 %v1082, %v1087
  %v1114 = vld [vmem:[%s10] sm:$0x1]
  %v1116 = vlaneseq
  %v1117 = vshrl.u32 %v1116, 7
  %v1118 = vsub.s32 0, %v1117
  %v1119 = vrot.slane %v1114, %v1118
  %v1121 = vadd.f32 %v1089, %v1119
  %v1122 = vadd.f32 %v1090, %v1119
  %v1123 = vadd.f32 %v1091, %v1119
  %v1124 = vadd.f32 %v1092, %v1119
  %v1125 = vadd.f32 %v1093, %v1119
  %v1126 = vadd.f32 %v1094, %v1119
  %v1127 = vadd.f32 %v1095, %v1119
  %v1128 = vadd.f32 %v1096, %v1119
  %v1129 = vadd.f32 %v1097, %v1119
  %v1130 = vadd.f32 %v1098, %v1119
  %v1131 = vadd.f32 %v1099, %v1119
  %v1132 = vadd.f32 %v1100, %v1119
  %v1133 = vadd.f32 %v1101, %v1119
  %v1134 = vadd.f32 %v1102, %v1119
  %v1135 = vadd.f32 %v1103, %v1119
  %v1136 = vadd.f32 %v1104, %v1119
  %v1137 = vadd.f32 %v1105, %v1119
  %v1138 = vadd.f32 %v1106, %v1119
  %v1139 = vadd.f32 %v1107, %v1119
  %v1140 = vadd.f32 %v1108, %v1119
  %v1141 = vadd.f32 %v1109, %v1119
  %v1142 = vadd.f32 %v1110, %v1119
  %v1143 = vadd.f32 %v1111, %v1119
  %v1144 = vadd.f32 %v1112, %v1119
  %v1145 = vadd.f32 %v1113, %v1119
  %v1146 = vmax.f32 %v1121, 0.0
  %v1147 = vmax.f32 %v1122, 0.0
  %v1148 = vmax.f32 %v1123, 0.0
  %v1149 = vmax.f32 %v1124, 0.0
  %v1150 = vmax.f32 %v1125, 0.0
  %v1151 = vmax.f32 %v1126, 0.0
  %v1152 = vmax.f32 %v1127, 0.0
  %v1153 = vmax.f32 %v1128, 0.0
  %v1154 = vmax.f32 %v1129, 0.0
  %v1155 = vmax.f32 %v1130, 0.0
  %v1156 = vmax.f32 %v1131, 0.0
  %v1157 = vmax.f32 %v1132, 0.0
  %v1158 = vmax.f32 %v1133, 0.0
  %v1159 = vmax.f32 %v1134, 0.0
  %v1160 = vmax.f32 %v1135, 0.0
  %v1161 = vmax.f32 %v1136, 0.0
  %v1162 = vmax.f32 %v1137, 0.0
  %v1163 = vmax.f32 %v1138, 0.0
  %v1164 = vmax.f32 %v1139, 0.0
  %v1165 = vmax.f32 %v1140, 0.0
  %v1166 = vmax.f32 %v1141, 0.0
  %v1167 = vmax.f32 %v1142, 0.0
  %v1168 = vmax.f32 %v1143, 0.0
  %v1169 = vmax.f32 %v1144, 0.0
  %v1170 = vmax.f32 %v1145, 0.0
  %v1171 = vpack.c.bf16 %v1147, %v1146
  %v1172 = vpack.c.bf16 %v1149, %v1148
  %v1173 = vpack.c.bf16 %v1151, %v1150
  %v1174 = vpack.c.bf16 %v1153, %v1152
  %v1175 = vpack.c.bf16 %v1155, %v1154
  %v1176 = vpack.c.bf16 %v1157, %v1156
  %v1177 = vpack.c.bf16 %v1159, %v1158
  %v1178 = vpack.c.bf16 %v1161, %v1160
  %v1179 = vpack.c.bf16 %v1163, %v1162
  %v1180 = vpack.c.bf16 %v1165, %v1164
  %v1181 = vpack.c.bf16 %v1167, %v1166
  %v1182 = vpack.c.bf16 %v1169, %v1168
  %v1183 = vpack.c.bf16 %v1170, %v1170
  %v1184 = vld [vmem:[%s3] sm:$0xf]
  %v1185 = vld [vmem:[%s3 + $0x4] sm:$0xf]
  %v1186 = vld [vmem:[%s3 + $0x8] sm:$0xf]
  %v1187 = vld [vmem:[%s3 + $0xc] sm:$0xf]
  %v1188 = vld [vmem:[%s3 + $0x10] sm:$0xf]
  %v1189 = vld [vmem:[%s3 + $0x14] sm:$0xf]
  %v1190 = vld [vmem:[%s3 + $0x18] sm:$0xf]
  %v1191 = vld [vmem:[%s3 + $0x1c] sm:$0xf]
  %v1192 = vld [vmem:[%s3 + $0x20] sm:$0xf]
  %v1193 = vld [vmem:[%s3 + $0x24] sm:$0xf]
  %v1194 = vld [vmem:[%s3 + $0x28] sm:$0xf]
  %v1195 = vld [vmem:[%s3 + $0x2c] sm:$0xf]
  %v1196 = vld [vmem:[%s3 + $0x30] sm:$0xf]
  %v1197 = vld [vmem:[%s3 + $0x34] sm:$0xf]
  %v1198 = vld [vmem:[%s3 + $0x38] sm:$0xf]
  %v1199 = vld [vmem:[%s3 + $0x3c] sm:$0xf]
  %v1200 = vld [vmem:[%s6] sm:$0x1]
  %v1202 = vlaneseq
  %v1203 = vshrl.u32 %v1202, 7
  %v1204 = vsub.s32 0, %v1203
  %v1205 = vrot.slane %v1200, %v1204
  %v1223 = vunpack.c.l.b16 %v1184
  %v1224 = vunpack.c.l.b16 %v1185
  %v1225 = vunpack.c.l.b16 %v1186
  %v1226 = vunpack.c.l.b16 %v1187
  %v1227 = vunpack.c.l.b16 %v1188
  %v1228 = vunpack.c.l.b16 %v1189
  %v1229 = vunpack.c.l.b16 %v1190
  %v1230 = vunpack.c.l.b16 %v1191
  %v1231 = vunpack.c.l.b16 %v1192
  %v1232 = vunpack.c.l.b16 %v1193
  %v1233 = vunpack.c.l.b16 %v1194
  %v1234 = vunpack.c.l.b16 %v1195
  %v1235 = vunpack.c.l.b16 %v1196
  %v1236 = vunpack.c.l.b16 %v1197
  %v1237 = vunpack.c.l.b16 %v1198
  %v1238 = vunpack.c.l.b16 %v1199
  %v1239 = vpack.c.b16 %v1224, %v1223
  %v1240 = vpack.c.b16 %v1226, %v1225
  %v1241 = vpack.c.b16 %v1228, %v1227
  %v1242 = vpack.c.b16 %v1230, %v1229
  %v1243 = vpack.c.b16 %v1232, %v1231
  %v1244 = vpack.c.b16 %v1234, %v1233
  %v1245 = vpack.c.b16 %v1236, %v1235
  %v1246 = vpack.c.b16 %v1238, %v1237
  %1255 = vmatprep.subr.bf16.mxu0 0
  %1256 = vmatpush1.bf16.msra.mxu0 %v1239
  %1257 = vmatprep.subr.bf16.mxu0 0
  %1258 = vmatpush1.bf16.msra.mxu0 %v1240
  %1259 = vmatprep.subr.bf16.mxu0 0
  %1260 = vmatpush1.bf16.msra.mxu0 %v1241
  %1261 = vmatprep.subr.bf16.mxu0 0
  %1262 = vmatpush1.bf16.msra.mxu0 %v1242
  %1263 = vmatprep.subr.bf16.mxu0 0
  %1264 = vmatpush1.bf16.msra.mxu0 %v1243
  %1265 = vmatprep.subr.bf16.mxu0 0
  %1266 = vmatpush1.bf16.msra.mxu0 %v1244
  %1267 = vmatprep.subr.bf16.mxu0 0
  %1268 = vmatpush1.bf16.msra.mxu0 %v1245
  %1269 = vmatprep.subr.bf16.mxu0 0
  %1270 = vmatpush1.bf16.msra.mxu0 %v1246
  %1271 = vmatprep.subr.bf16.mxu0 0
  %1272 = vmatpush1.bf16.msra.mxu0 0
  %1273 = vmatprep.subr.bf16.mxu0 0
  %1274 = vmatpush1.bf16.msra.mxu0 0
  %1275 = vmatprep.subr.bf16.mxu0 0
  %1276 = vmatpush1.bf16.msra.mxu0 0
  %1277 = vmatprep.subr.bf16.mxu0 0
  %1278 = vmatpush1.bf16.msra.mxu0 0
  %1279 = vmatprep.subr.bf16.mxu0 0
  %1280 = vmatpush1.bf16.msra.mxu0 0
  %1281 = vmatprep.subr.bf16.mxu0 0
  %1282 = vmatpush1.bf16.msra.mxu0 0
  %1283 = vmatprep.subr.bf16.mxu0 0
  %1284 = vmatpush1.bf16.msra.mxu0 0
  %1285 = vmatprep.subr.bf16.mxu0 0
  %1286 = vmatpush1.bf16.msra.mxu0 0
  %1287 = vmatprep.mubr.bf16.mxu0 0
  %1288 = vmatmul.mubr.bf16.gmra.mrb[0].mxu0 %v1171
  %v1289 = vpop.f32.mrb[0].mxu0
  %v1290 = vadd.f32 %v1205, %v1289
  %v1291 = vpop.f32.mrb[0].mxu0
  %v1292 = vpop.f32.mrb[0].mxu0
  %v1293 = vadd.f32 %v1205, %v1292
  %v1294 = vpop.f32.mrb[0].mxu0
  %1295 = vmatprep.mubr.bf16.mxu0 0
  %1296 = vmatmul.mubr.bf16.gmra.mrb[0].mxu0 %v1172
  %v1297 = vpop.f32.mrb[0].mxu0
  %v1298 = vadd.f32 %v1205, %v1297
  %v1299 = vpop.f32.mrb[0].mxu0
  %v1300 = vpop.f32.mrb[0].mxu0
  %v1301 = vadd.f32 %v1205, %v1300
  %v1302 = vpop.f32.mrb[0].mxu0
  %1303 = vmatprep.mubr.bf16.mxu0 0
  %1304 = vmatmul.mubr.bf16.gmra.mrb[0].mxu0 %v1173
  %v1305 = vpop.f32.mrb[0].mxu0
  %v1306 = vadd.f32 %v1205, %v1305
  %v1307 = vpop.f32.mrb[0].mxu0
  %v1308 = vpop.f32.mrb[0].mxu0
  %v1309 = vadd.f32 %v1205, %v1308
  %v1310 = vpop.f32.mrb[0].mxu0
  %1311 = vmatprep.mubr.bf16.mxu0 0
  %1312 = vmatmul.mubr.bf16.gmra.mrb[0].mxu0 %v1174
  %v1313 = vpop.f32.mrb[0].mxu0
  %v1314 = vadd.f32 %v1205, %v1313
  %v1315 = vpop.f32.mrb[0].mxu0
  %v1316 = vpop.f32.mrb[0].mxu0
  %v1317 = vadd.f32 %v1205, %v1316
  %v1318 = vpop.f32.mrb[0].mxu0
  %1319 = vmatprep.mubr.bf16.mxu0 0
  %1320 = vmatmul.mubr.bf16.gmra.mrb[0].mxu0 %v1175
  %v1321 = vpop.f32.mrb[0].mxu0
  %v1322 = vadd.f32 %v1205, %v1321
  %v1323 = vpop.f32.mrb[0].mxu0
  %v1324 = vpop.f32.mrb[0].mxu0
  %v1325 = vadd.f32 %v1205, %v1324
  %v1326 = vpop.f32.mrb[0].mxu0
  %1327 = vmatprep.mubr.bf16.mxu0 0
  %1328 = vmatmul.mubr.bf16.gmra.mrb[0].mxu0 %v1176
  %v1329 = vpop.f32.mrb[0].mxu0
  %v1330 = vadd.f32 %v1205, %v1329
  %v1331 = vpop.f32.mrb[0].mxu0
  %v1332 = vpop.f32.mrb[0].mxu0
  %v1333 = vadd.f32 %v1205, %v1332
  %v1334 = vpop.f32.mrb[0].mxu0
  %1335 = vmatprep.mubr.bf16.mxu0 0
  %1336 = vmatmul.mubr.bf16.gmra.mrb[0].mxu0 %v1177
  %v1337 = vpop.f32.mrb[0].mxu0
  %v1338 = vadd.f32 %v1205, %v1337
  %v1339 = vpop.f32.mrb[0].mxu0
  %v1340 = vpop.f32.mrb[0].mxu0
  %v1341 = vadd.f32 %v1205, %v1340
  %v1342 = vpop.f32.mrb[0].mxu0
  %1343 = vmatprep.mubr.bf16.mxu0 0
  %1344 = vmatmul.mubr.bf16.gmra.mrb[0].mxu0 %v1178
  %v1345 = vpop.f32.mrb[0].mxu0
  %v1346 = vadd.f32 %v1205, %v1345
  %v1347 = vpop.f32.mrb[0].mxu0
  %v1348 = vpop.f32.mrb[0].mxu0
  %v1349 = vadd.f32 %v1205, %v1348
  %v1350 = vpop.f32.mrb[0].mxu0
  %1351 = vmatprep.mubr.bf16.mxu0 0
  %1352 = vmatmul.mubr.bf16.gmra.mrb[0].mxu0 %v1179
  %v1353 = vpop.f32.mrb[0].mxu0
  %v1354 = vadd.f32 %v1205, %v1353
  %v1355 = vpop.f32.mrb[0].mxu0
  %v1356 = vpop.f32.mrb[0].mxu0
  %v1357 = vadd.f32 %v1205, %v1356
  %v1358 = vpop.f32.mrb[0].mxu0
  %1359 = vmatprep.mubr.bf16.mxu0 0
  %1360 = vmatmul.mubr.bf16.gmra.mrb[0].mxu0 %v1180
  %v1361 = vpop.f32.mrb[0].mxu0
  %v1362 = vadd.f32 %v1205, %v1361
  %v1363 = vpop.f32.mrb[0].mxu0
  %v1364 = vpop.f32.mrb[0].mxu0
  %v1365 = vadd.f32 %v1205, %v1364
  %v1366 = vpop.f32.mrb[0].mxu0
  %1367 = vmatprep.mubr.bf16.mxu0 0
  %1368 = vmatmul.mubr.bf16.gmra.mrb[0].mxu0 %v1181
  %v1369 = vpop.f32.mrb[0].mxu0
  %v1370 = vadd.f32 %v1205, %v1369
  %v1371 = vpop.f32.mrb[0].mxu0
  %v1372 = vpop.f32.mrb[0].mxu0
  %v1373 = vadd.f32 %v1205, %v1372
  %v1374 = vpop.f32.mrb[0].mxu0
  %1375 = vmatprep.mubr.bf16.mxu0 0
  %1376 = vmatmul.mubr.bf16.gmra.mrb[0].mxu0 %v1182
  %v1377 = vpop.f32.mrb[0].mxu0
  %v1378 = vadd.f32 %v1205, %v1377
  %v1379 = vpop.f32.mrb[0].mxu0
  %v1380 = vpop.f32.mrb[0].mxu0
  %v1381 = vadd.f32 %v1205, %v1380
  %v1382 = vpop.f32.mrb[0].mxu0
  %1383 = vmatprep.mubr.bf16.mxu0 0
  %1384 = vmatmul.mubr.bf16.gmra.mrb[0].mxu0 %v1183
  %v1385 = vpop.f32.mrb[0].mxu0
  %v1386 = vadd.f32 %v1205, %v1385
  %v1387 = vpop.f32.mrb[0].mxu0
  %v1388 = vpop.f32.mrb[0].mxu0
  %v1389 = vpop.f32.mrb[0].mxu0
  %1390 = vdwg.mxu0
  %1391 = vst [vmem:[%s11] sm:$0xff] %v1290
  %1392 = vst [vmem:[%s11 + $0x8] sm:$0xff] %v1293
  %1393 = vst [vmem:[%s11 + $0x10] sm:$0xff] %v1298
  %1394 = vst [vmem:[%s11 + $0x18] sm:$0xff] %v1301
  %1395 = vst [vmem:[%s11 + $0x20] sm:$0xff] %v1306
  %1396 = vst [vmem:[%s11 + $0x28] sm:$0xff] %v1309
  %1397 = vst [vmem:[%s11 + $0x30] sm:$0xff] %v1314
  %1398 = vst [vmem:[%s11 + $0x38] sm:$0xff] %v1317
  %1399 = vst [vmem:[%s11 + $0x40] sm:$0xff] %v1322
  %1400 = vst [vmem:[%s11 + $0x48] sm:$0xff] %v1325
  %1401 = vst [vmem:[%s11 + $0x50] sm:$0xff] %v1330
  %1402 = vst [vmem:[%s11 + $0x58] sm:$0xff] %v1333
  %1403 = vst [vmem:[%s11 + $0x60] sm:$0xff] %v1338
  %1404 = vst [vmem:[%s11 + $0x68] sm:$0xff] %v1341
  %1405 = vst [vmem:[%s11 + $0x70] sm:$0xff] %v1346
  %1406 = vst [vmem:[%s11 + $0x78] sm:$0xff] %v1349
  %1407 = vst [vmem:[%s11 + $0x80] sm:$0xff] %v1354
  %1408 = vst [vmem:[%s11 + $0x88] sm:$0xff] %v1357
  %1409 = vst [vmem:[%s11 + $0x90] sm:$0xff] %v1362
  %1410 = vst [vmem:[%s11 + $0x98] sm:$0xff] %v1365
  %1411 = vst [vmem:[%s11 + $0xa0] sm:$0xff] %v1370
  %1412 = vst [vmem:[%s11 + $0xa8] sm:$0xff] %v1373
  %1413 = vst [vmem:[%s11 + $0xb0] sm:$0xff] %v1378
  %1414 = vst [vmem:[%s11 + $0xb8] sm:$0xff] %v1381
  %1415 = vst [vmem:[%s11 + $0xc0] sm:$0xff] %v1386
  // Predicated region
  $region46: #{mlp_decoder_forward.1} parent=0 // pred_check
    _
  $region47: #{mlp_decoder_forward.1} parent=0 // pred_check_branch
    %1417 = sbr.rel (0) target = $region49
  $region48: #{mlp_decoder_forward.1} parent=0 // pred_region
    _
  $region49: #{mlp_decoder_forward.1} parent=0 // pred_fallthru
    _
  // Predicated region
  $region50: #{mlp_decoder_forward.1} parent=0 // pred_check
    _
  $region51: #{mlp_decoder_forward.1} parent=0 // pred_check_branch
    %1419 = sbr.rel (0) target = $region53
  $region52: #{mlp_decoder_forward.1} parent=0 // pred_region
    _
  $region53: #{mlp_decoder_forward.1} parent=0 // pred_fallthru
    _

</llo_original>
